<compile_context>
chip_gen: v7x
topology: tpu7x:2x2x1
jax: 0.10.0
libtpu: 0.0.40
codegen_flags: <defaults>
</compile_context>

<pallas_src>
import functools
import math

import jax
import jax.numpy as jnp
from jax.experimental import pallas as pl
from jax.experimental.pallas import tpu as pltpu


def _dice_group_kernel(seed_ref, x_ref, lo_ref, hi_ref, q_ref, o_ref, *, d, tf):
    """One grid step = one group of `tf` features (tf fused _DICE modules).

    seed_ref: SMEM (1,)      int32   -- seed (scalar prefetch)
    x_ref:    VMEM (B, tf)   float32 -- this group's columns of x
    lo_ref:   VMEM (1, tf)   float32 -- per-feature x_min
    hi_ref:   VMEM (1, tf)   float32 -- per-feature x_max
    q_ref:    VMEM (n, n)    float32 -- block-diagonal packed Q (n = tf * d)
    o_ref:    VMEM (B, n)    float32 -- lane-dense embeddings for the group
    """
    g = pl.program_id(0)
    x = x_ref[...]                       # (B, tf)
    lo = lo_ref[...]                     # (1, tf)
    hi = hi_ref[...]                     # (1, tf)
    B = x.shape[0]
    n = tf * d

    # Normalize to [0, 1].
    xn = (x - lo) / (hi - lo)
    in_range = jnp.logical_and(xn >= 0.0, xn <= 1.0)

    # Out-of-range values get a uniform(-pi, pi) angle like torch's
    # .uniform_() fallback.  Deterministic position-indexed float hash.
    # TODO(synk): not bit-identical to torch.empty_like(x).uniform_() (torch's
    # draw is not reproducible either).
    fcol = jax.lax.broadcasted_iota(jnp.int32, (B, tf), 1)
    frow = jax.lax.broadcasted_iota(jnp.int32, (B, tf), 0)
    seed_f = seed_ref[0].astype(jnp.float32)
    gbase_f = (g * tf).astype(jnp.float32)
    t = ((fcol.astype(jnp.float32) + gbase_f) * jnp.float32(78.233)
         + frow.astype(jnp.float32) * jnp.float32(12.9898)
         + seed_f * jnp.float32(0.618034) + jnp.float32(0.5))
    u = jnp.sin(t) * jnp.float32(43758.5453)
    u01 = u - jnp.floor(u)                               # [0, 1)
    rand = (2.0 * u01 - 1.0) * jnp.float32(jnp.pi)       # [-pi, pi)

    theta = jnp.where(in_range, xn * jnp.float32(jnp.pi), rand)   # (B, tf)

    # Replicate each feature's angle across its d embedding lanes with a tiny
    # 0/1 matmul: theta_rep[:, f*d + e] = theta[:, f].
    rrow = jax.lax.broadcasted_iota(jnp.int32, (tf, n), 0)
    rcol = jax.lax.broadcasted_iota(jnp.int32, (tf, n), 1)
    rep = jnp.logical_and(rcol >= rrow * d, rcol < (rrow + 1) * d)
    rep = rep.astype(jnp.float32)                        # (tf, n)
    theta_rep = jnp.dot(theta, rep, preferred_element_type=jnp.float32)

    s = jnp.sin(theta_rep)                               # (B, n)
    c = jnp.cos(theta_rep)                               # (B, n)

    # Per-lane embedding index e = lane % d (computed without integer div/rem).
    col_f = jax.lax.broadcasted_iota(jnp.int32, (B, n), 1).astype(jnp.float32)
    base_f = jnp.floor((col_f + 0.5) * jnp.float32(1.0 / d)) * jnp.float32(d)
    e_idx = (col_f - base_f).astype(jnp.int32)           # in [0, d)

    # powers[:, f*d + e] = sin(theta_f)^e via binary exponentiation.
    powers = jnp.ones((B, n), jnp.float32)
    s_pow = s
    nbits = max(1, (d - 1).bit_length())
    for b in range(nbits):
        bit_set = ((e_idx >> b) & 1) == 1
        powers = jnp.where(bit_set, powers * s_pow, powers)
        if b + 1 < nbits:
            s_pow = s_pow * s_pow

    # columns e < d-1: cos * sin^e ; column e = d-1: sin^(d-1)
    feats = powers * jnp.where(e_idx < d - 1, c, jnp.float32(1.0))   # (B, n)

    # One lane-dense MXU matmul against the block-diagonal packed Q.
    o_ref[...] = jnp.dot(feats, q_ref[...], preferred_element_type=jnp.float32)


@jax.jit
def dice_embeddings(x, Q, lower, upper, seed):
    """x: (B, F) f32; Q: (F, d, d) f32; lower/upper: (F,) f32; seed: (1,) i32.

    Returns (B, F, d) f32, matching DICEEmbeddings.forward (exactly for
    in-range values; out-of-range values get a deterministic uniform angle).
    """
    B, F = x.shape
    d = Q.shape[-1]

    # Group size: smallest tf with tf*d a multiple of 128 (lane-dense output),
    # unless all F features fit in a single group anyway.
    tf_ideal = 128 // math.gcd(d, 128)
    tf = F if F <= tf_ideal else tf_ideal
    G = -(-F // tf)
    Fp = G * tf
    if Fp != F:   # pad feature axis; padded features are sliced off at the end
        pad = Fp - F
        x = jnp.pad(x, ((0, 0), (0, pad)))
        lower = jnp.pad(lower, (0, pad))
        upper = jnp.pad(upper, (0, pad), constant_values=1.0)
        Q = jnp.pad(Q, ((0, pad), (0, 0), (0, 0)))
    n = tf * d

    x_g = jnp.transpose(x.reshape(B, G, tf), (1, 0, 2))     # (G, B, tf), tiny
    lo_g = lower.reshape(G, 1, tf)
    hi_g = upper.reshape(G, 1, tf)

    # Block-diagonal packed Q per group:
    #   Qblk[g, t*d + a, s*d + b] = Q[g*tf + t, a, b] * (t == s)
    eye = jnp.eye(tf, dtype=Q.dtype)
    Qblk = jnp.einsum("gtab,ts->gtasb", Q.reshape(G, tf, d, d), eye)
    Qblk = Qblk.reshape(G, n, n)

    kernel = functools.partial(_dice_group_kernel, d=d, tf=tf)
    out = pl.pallas_call(
        kernel,
        out_shape=jax.ShapeDtypeStruct((B, Fp * d), jnp.float32),
        grid_spec=pltpu.PrefetchScalarGridSpec(
            num_scalar_prefetch=1,                 # seed -> SMEM
            grid=(G,),
            in_specs=[
                pl.BlockSpec((None, B, tf), lambda g, *_: (g, 0, 0)),  # x group
                pl.BlockSpec((None, 1, tf), lambda g, *_: (g, 0, 0)),  # lower
                pl.BlockSpec((None, 1, tf), lambda g, *_: (g, 0, 0)),  # upper
                pl.BlockSpec((None, n, n), lambda g, *_: (g, 0, 0)),   # packed Q
            ],
            out_specs=pl.BlockSpec((B, n), lambda g, *_: (0, g)),
        ),
        compiler_params=pltpu.CompilerParams(
            dimension_semantics=("parallel",)),    # groups are independent
    )(seed, x_g, lo_g, hi_g, Qblk)                 # (B, Fp*d), lane-dense

    return out[:, : F * d].reshape(B, F, d)        # free reshape, no transpose


def dice_reference(x, Q, lower, upper):
    """Pure-JAX reference (valid when all normalized values lie in [0, 1])."""
    d = Q.shape[-1]
    xn = (x - lower[None, :]) / (upper - lower)[None, :]
    theta = xn * jnp.pi                              # (B, F)
    s = jnp.sin(theta)
    c = jnp.cos(theta)
    e = jnp.arange(d - 1, dtype=x.dtype)
    feats = jnp.concatenate(
        [c[..., None] * s[..., None] ** e, (s ** (d - 1))[..., None]], axis=-1)
    return jnp.einsum("bfi,fij->bfj", feats, Q)


if __name__ == "__main__":
    B, F, d = 32, 32, 8          # -> two lane-dense groups of 16 features each

    key = jax.random.PRNGKey(0)
    k_q, k_x, k_lo, k_w = jax.random.split(key, 4)

    # Per-feature bounds (lower_bounds / upper_bounds lists).
    lower = jax.random.uniform(k_lo, (F,), jnp.float32, -3.0, 0.0)
    upper = lower + jax.random.uniform(k_w, (F,), jnp.float32, 0.5, 4.0)

    # Deterministic per-feature orthogonal Q (QR of random Gaussians),
    # mirroring _DICE.__init__.
    M = jax.random.normal(k_q, (F, d, d), jnp.float32)
    Q = jnp.linalg.qr(M)[0]                          # (F, d, d)

    # Inputs drawn inside the bounds so the (non-torch-reproducible) random
    # fallback branch is not exercised and the reference matches exactly.
    u = jax.random.uniform(k_x, (B, F), jnp.float32)
    x = lower[None, :] + u * (upper - lower)[None, :]

    seed = jnp.array([0], jnp.int32)

    out = dice_embeddings(x, Q, lower, upper, seed)
    jax.block_until_ready(out)

    ref = dice_reference(x, Q, lower, upper)
    assert out.shape == (B, F, d), out.shape
    err = float(jnp.max(jnp.abs(out - ref)))
    assert jnp.allclose(out, ref, rtol=1e-3, atol=1e-4), err

    print("KERNEL_OK")
</pallas_src>

<mosaic_0001>
module attributes {stable_mosaic.version = 11 : i64} {
  func.func @_dice_group_kernel(%arg0: i32, %arg1: memref<1xi32, #tpu.memory_space<smem>>, %arg2: memref<1x32x16xf32, #tpu.memory_space<vmem>>, %arg3: memref<1x1x16xf32, #tpu.memory_space<vmem>>, %arg4: memref<1x1x16xf32, #tpu.memory_space<vmem>>, %arg5: memref<1x128x128xf32, #tpu.memory_space<vmem>>, %arg6: memref<32x128xf32, #tpu.memory_space<vmem>>) attributes {dimension_semantics = [#tpu.dimension_semantics<parallel>], iteration_bounds = array<i64: 2>, scalar_prefetch = 1 : i64, scratch_operands = 0 : i64, tpu.core_type = #tpu.core_type<tc>, window_params = [{transform_indices = @transform_0, window_bounds = array<i64: 1, 32, 16>}, {transform_indices = @transform_1, window_bounds = array<i64: 1, 1, 16>}, {transform_indices = @transform_2, window_bounds = array<i64: 1, 1, 16>}, {transform_indices = @transform_3, window_bounds = array<i64: 1, 128, 128>}, {transform_indices = @transform_4, window_bounds = array<i64: 32, 128>}]} {
    %c0 = arith.constant 0 : index
    %c0_0 = arith.constant 0 : index
    %c0_1 = arith.constant 0 : index
    %0 = vector.load %arg2[%c0, %c0_0, %c0_1] : memref<1x32x16xf32, #tpu.memory_space<vmem>>, vector<1x32x16xf32>
    %1 = vector.shape_cast %0 : vector<1x32x16xf32> to vector<32x16xf32>
    %c0_2 = arith.constant 0 : index
    %c0_3 = arith.constant 0 : index
    %c0_4 = arith.constant 0 : index
    %2 = vector.load %arg3[%c0_2, %c0_3, %c0_4] : memref<1x1x16xf32, #tpu.memory_space<vmem>>, vector<1x1x16xf32>
    %3 = vector.shape_cast %2 : vector<1x1x16xf32> to vector<1x16xf32>
    %c0_5 = arith.constant 0 : index
    %c0_6 = arith.constant 0 : index
    %c0_7 = arith.constant 0 : index
    %4 = vector.load %arg4[%c0_5, %c0_6, %c0_7] : memref<1x1x16xf32, #tpu.memory_space<vmem>>, vector<1x1x16xf32>
    %5 = vector.shape_cast %4 : vector<1x1x16xf32> to vector<1x16xf32>
    %6 = vector.broadcast %3 : vector<1x16xf32> to vector<32x16xf32>
    %7 = arith.subf %1, %6 : vector<32x16xf32>
    %8 = arith.subf %5, %3 : vector<1x16xf32>
    %9 = vector.broadcast %8 : vector<1x16xf32> to vector<32x16xf32>
    %10 = arith.divf %7, %9 : vector<32x16xf32>
    %cst = arith.constant 0.000000e+00 : f32
    %11 = vector.broadcast %cst : f32 to vector<32x16xf32>
    %12 = arith.cmpf oge, %10, %11 : vector<32x16xf32>
    %cst_8 = arith.constant 1.000000e+00 : f32
    %13 = vector.broadcast %cst_8 : f32 to vector<32x16xf32>
    %14 = arith.cmpf ole, %10, %13 : vector<32x16xf32>
    %15 = arith.andi %12, %14 : vector<32x16xi1>
    %16 = tpu.iota {dimensions = array<i32: 1>} : vector<32x16xi32>
    %17 = tpu.iota {dimensions = array<i32: 0>} : vector<32x16xi32>
    %c0_9 = arith.constant 0 : index
    %18 = memref.load %arg1[%c0_9] : memref<1xi32, #tpu.memory_space<smem>>
    %19 = arith.sitofp %18 : i32 to f32
    %c16_i32 = arith.constant 16 : i32
    %20 = arith.muli %arg0, %c16_i32 : i32
    %21 = arith.sitofp %20 : i32 to f32
    %22 = arith.sitofp %16 : vector<32x16xi32> to vector<32x16xf32>
    %23 = vector.broadcast %21 : f32 to vector<32x16xf32>
    %24 = arith.addf %22, %23 : vector<32x16xf32>
    %cst_10 = arith.constant 7.823300e+01 : f32
    %25 = vector.broadcast %cst_10 : f32 to vector<32x16xf32>
    %26 = arith.mulf %24, %25 : vector<32x16xf32>
    %27 = arith.sitofp %17 : vector<32x16xi32> to vector<32x16xf32>
    %cst_11 = arith.constant 1.298980e+01 : f32
    %28 = vector.broadcast %cst_11 : f32 to vector<32x16xf32>
    %29 = arith.mulf %27, %28 : vector<32x16xf32>
    %30 = arith.addf %26, %29 : vector<32x16xf32>
    %cst_12 = arith.constant 6.180340e-01 : f32
    %31 = arith.mulf %19, %cst_12 : f32
    %32 = vector.broadcast %31 : f32 to vector<32x16xf32>
    %33 = arith.addf %30, %32 : vector<32x16xf32>
    %cst_13 = arith.constant 5.000000e-01 : f32
    %34 = vector.broadcast %cst_13 : f32 to vector<32x16xf32>
    %35 = arith.addf %33, %34 : vector<32x16xf32>
    %36 = math.sin %35 : vector<32x16xf32>
    %cst_14 = arith.constant 43758.5469 : f32
    %37 = vector.broadcast %cst_14 : f32 to vector<32x16xf32>
    %38 = arith.mulf %36, %37 : vector<32x16xf32>
    %39 = math.floor %38 : vector<32x16xf32>
    %40 = arith.subf %38, %39 : vector<32x16xf32>
    %cst_15 = arith.constant 2.000000e+00 : f32
    %41 = vector.broadcast %cst_15 : f32 to vector<32x16xf32>
    %42 = arith.mulf %41, %40 : vector<32x16xf32>
    %cst_16 = arith.constant 1.000000e+00 : f32
    %43 = vector.broadcast %cst_16 : f32 to vector<32x16xf32>
    %44 = arith.subf %42, %43 : vector<32x16xf32>
    %cst_17 = arith.constant 3.14159274 : f32
    %45 = vector.broadcast %cst_17 : f32 to vector<32x16xf32>
    %46 = arith.mulf %44, %45 : vector<32x16xf32>
    %cst_18 = arith.constant 3.14159274 : f32
    %47 = vector.broadcast %cst_18 : f32 to vector<32x16xf32>
    %48 = arith.mulf %10, %47 : vector<32x16xf32>
    %49 = arith.select %15, %48, %46 : vector<32x16xi1>, vector<32x16xf32>
    %50 = tpu.iota {dimensions = array<i32: 0>} : vector<16x128xi32>
    %51 = tpu.iota {dimensions = array<i32: 1>} : vector<16x128xi32>
    %c8_i32 = arith.constant 8 : i32
    %52 = vector.broadcast %c8_i32 : i32 to vector<16x128xi32>
    %53 = arith.muli %50, %52 : vector<16x128xi32>
    %54 = arith.cmpi sge, %51, %53 : vector<16x128xi32>
    %c1_i32 = arith.constant 1 : i32
    %55 = vector.broadcast %c1_i32 : i32 to vector<16x128xi32>
    %56 = arith.addi %50, %55 : vector<16x128xi32>
    %c8_i32_19 = arith.constant 8 : i32
    %57 = vector.broadcast %c8_i32_19 : i32 to vector<16x128xi32>
    %58 = arith.muli %56, %57 : vector<16x128xi32>
    %59 = arith.cmpi slt, %51, %58 : vector<16x128xi32>
    %60 = arith.andi %54, %59 : vector<16x128xi1>
    %61 = arith.extui %60 : vector<16x128xi1> to vector<16x128xi32>
    %62 = arith.sitofp %61 : vector<16x128xi32> to vector<16x128xf32>
    %cst_20 = arith.constant dense<0.000000e+00> : vector<32x128xf32>
    %63 = tpu.matmul %49, %62, %cst_20 {dimension_numbers = #tpu.dot_dimension_numbers<[1], [0], [0], [1], [0, 0, 1, 1], [], []>} : vector<32x16xf32>, vector<16x128xf32>, vector<32x128xf32> -> vector<32x128xf32>
    %64 = math.sin %63 : vector<32x128xf32>
    %65 = math.cos %63 : vector<32x128xf32>
    %66 = tpu.iota {dimensions = array<i32: 1>} : vector<32x128xi32>
    %67 = arith.sitofp %66 : vector<32x128xi32> to vector<32x128xf32>
    %cst_21 = arith.constant 5.000000e-01 : f32
    %68 = vector.broadcast %cst_21 : f32 to vector<32x128xf32>
    %69 = arith.addf %67, %68 : vector<32x128xf32>
    %cst_22 = arith.constant 1.250000e-01 : f32
    %70 = vector.broadcast %cst_22 : f32 to vector<32x128xf32>
    %71 = arith.mulf %69, %70 : vector<32x128xf32>
    %72 = math.floor %71 : vector<32x128xf32>
    %cst_23 = arith.constant 8.000000e+00 : f32
    %73 = vector.broadcast %cst_23 : f32 to vector<32x128xf32>
    %74 = arith.mulf %72, %73 : vector<32x128xf32>
    %75 = arith.subf %67, %74 : vector<32x128xf32>
    %76 = arith.fptosi %75 : vector<32x128xf32> to vector<32x128xi32>
    %cst_24 = arith.constant 1.000000e+00 : f32
    %77 = vector.broadcast %cst_24 : f32 to vector<32x128xf32>
    %c0_i32 = arith.constant 0 : i32
    %78 = vector.broadcast %c0_i32 : i32 to vector<32x128xi32>
    %79 = arith.shrsi %76, %78 : vector<32x128xi32>
    %c1_i32_25 = arith.constant 1 : i32
    %80 = vector.broadcast %c1_i32_25 : i32 to vector<32x128xi32>
    %81 = arith.andi %79, %80 : vector<32x128xi32>
    %c1_i32_26 = arith.constant 1 : i32
    %82 = vector.broadcast %c1_i32_26 : i32 to vector<32x128xi32>
    %83 = arith.cmpi eq, %81, %82 : vector<32x128xi32>
    %84 = arith.mulf %77, %64 : vector<32x128xf32>
    %85 = arith.select %83, %84, %77 : vector<32x128xi1>, vector<32x128xf32>
    %86 = arith.mulf %64, %64 : vector<32x128xf32>
    %c1_i32_27 = arith.constant 1 : i32
    %87 = vector.broadcast %c1_i32_27 : i32 to vector<32x128xi32>
    %88 = arith.shrsi %76, %87 : vector<32x128xi32>
    %c1_i32_28 = arith.constant 1 : i32
    %89 = vector.broadcast %c1_i32_28 : i32 to vector<32x128xi32>
    %90 = arith.andi %88, %89 : vector<32x128xi32>
    %c1_i32_29 = arith.constant 1 : i32
    %91 = vector.broadcast %c1_i32_29 : i32 to vector<32x128xi32>
    %92 = arith.cmpi eq, %90, %91 : vector<32x128xi32>
    %93 = arith.mulf %85, %86 : vector<32x128xf32>
    %94 = arith.select %92, %93, %85 : vector<32x128xi1>, vector<32x128xf32>
    %95 = arith.mulf %86, %86 : vector<32x128xf32>
    %c2_i32 = arith.constant 2 : i32
    %96 = vector.broadcast %c2_i32 : i32 to vector<32x128xi32>
    %97 = arith.shrsi %76, %96 : vector<32x128xi32>
    %c1_i32_30 = arith.constant 1 : i32
    %98 = vector.broadcast %c1_i32_30 : i32 to vector<32x128xi32>
    %99 = arith.andi %97, %98 : vector<32x128xi32>
    %c1_i32_31 = arith.constant 1 : i32
    %100 = vector.broadcast %c1_i32_31 : i32 to vector<32x128xi32>
    %101 = arith.cmpi eq, %99, %100 : vector<32x128xi32>
    %102 = arith.mulf %94, %95 : vector<32x128xf32>
    %103 = arith.select %101, %102, %94 : vector<32x128xi1>, vector<32x128xf32>
    %c7_i32 = arith.constant 7 : i32
    %104 = vector.broadcast %c7_i32 : i32 to vector<32x128xi32>
    %105 = arith.cmpi slt, %76, %104 : vector<32x128xi32>
    %cst_32 = arith.constant 1.000000e+00 : f32
    %106 = vector.broadcast %cst_32 : f32 to vector<32x128xf32>
    %107 = arith.select %105, %65, %106 : vector<32x128xi1>, vector<32x128xf32>
    %108 = arith.mulf %103, %107 : vector<32x128xf32>
    %c0_33 = arith.constant 0 : index
    %c0_34 = arith.constant 0 : index
    %c0_35 = arith.constant 0 : index
    %109 = vector.load %arg5[%c0_33, %c0_34, %c0_35] : memref<1x128x128xf32, #tpu.memory_space<vmem>>, vector<1x128x128xf32>
    %110 = vector.shape_cast %109 : vector<1x128x128xf32> to vector<128x128xf32>
    %cst_36 = arith.constant dense<0.000000e+00> : vector<32x128xf32>
    %111 = tpu.matmul %108, %110, %cst_36 {dimension_numbers = #tpu.dot_dimension_numbers<[1], [0], [0], [1], [0, 0, 1, 1], [], []>} : vector<32x128xf32>, vector<128x128xf32>, vector<32x128xf32> -> vector<32x128xf32>
    %c0_37 = arith.constant 0 : index
    %c0_38 = arith.constant 0 : index
    %112 = vector.load %arg6[%c0_37, %c0_38] : memref<32x128xf32, #tpu.memory_space<vmem>>, vector<32x128xf32>
    tpu.vector_store %arg6[%c0_37, %c0_38], %111 {strides = array<i32>} : memref<32x128xf32, #tpu.memory_space<vmem>>, vector<32x128xf32>,
    return
  }
  func.func @transform_0(%arg0: i32, %arg1: memref<1xi32, #tpu.memory_space<smem>>) -> (i32, i32, i32) {
    %c0_i32 = arith.constant 0 : i32
    %c0_i32_0 = arith.constant 0 : i32
    %c0_i32_1 = arith.constant 0 : i32
    return %arg0, %c0_i32, %c0_i32_0 : i32, i32, i32
  }
  func.func @transform_1(%arg0: i32, %arg1: memref<1xi32, #tpu.memory_space<smem>>) -> (i32, i32, i32) {
    %c0_i32 = arith.constant 0 : i32
    %c0_i32_0 = arith.constant 0 : i32
    %c0_i32_1 = arith.constant 0 : i32
    return %arg0, %c0_i32, %c0_i32_0 : i32, i32, i32
  }
  func.func @transform_2(%arg0: i32, %arg1: memref<1xi32, #tpu.memory_space<smem>>) -> (i32, i32, i32) {
    %c0_i32 = arith.constant 0 : i32
    %c0_i32_0 = arith.constant 0 : i32
    %c0_i32_1 = arith.constant 0 : i32
    return %arg0, %c0_i32, %c0_i32_0 : i32, i32, i32
  }
  func.func @transform_3(%arg0: i32, %arg1: memref<1xi32, #tpu.memory_space<smem>>) -> (i32, i32, i32) {
    %c0_i32 = arith.constant 0 : i32
    %c0_i32_0 = arith.constant 0 : i32
    %c0_i32_1 = arith.constant 0 : i32
    return %arg0, %c0_i32, %c0_i32_0 : i32, i32, i32
  }
  func.func @transform_4(%arg0: i32, %arg1: memref<1xi32, #tpu.memory_space<smem>>) -> (i32, i32) {
    %c0_i32 = arith.constant 0 : i32
    %c0_i32_0 = arith.constant 0 : i32
    return %c0_i32, %arg0 : i32, i32
  }
}

</mosaic_0001>

<llo_original>
// kernel: dice_embeddings.1
$region0: #{dice_embeddings.1}
  #allocation0 [shape = 'u32[]', space=smem, size = 0x4, offset = 0x4, fixed_abs, tag = 'smem constant byte address 0x4 - core index']
  #allocation1 [shape = 'u32[144,128]{1,0:T(1,128)}', space=vmem, size = 0x12000, scoped, tag = 'internal scratch']
  #allocation2 [shape = 's32[1]{0}', space=sflag, size = 0x4, scoped, tag = 'scoped memory for dice_embeddings.1']
  #allocation3 [shape = 's32[1]{0:T(128)S(6)}', space=smem, size = 0x200, scoped, tag = 'prefetched SMEM operand 0']
  %s0 = inlined_call_operand.<no memory space> [shape: s32[1], index: 0, kind: input, shape index: {}]
  %s1 = inlined_call_operand.vmem [shape: f32[2,32,16], index: 1, kind: input, shape index: {}]
  %s2 = inlined_call_operand.vmem [shape: f32[2,1,16], index: 2, kind: input, shape index: {}]
  %s3 = inlined_call_operand.vmem [shape: f32[2,1,16], index: 3, kind: input, shape index: {}]
  %s4 = inlined_call_operand.vmem [shape: f32[2,128,128], index: 4, kind: input, shape index: {}]
  %s5 = inlined_call_operand.vmem [shape: f32[32,256], index: 5, kind: output, shape index: {}]
  %s6 = sld [smem:[#allocation0]]
  $region83: #{dice_embeddings.1} parent=0
    _
  %s8 = ssub.s32 1, %s6
  %s9 = scalar_select 0, %s8, %s6
  %10 = sst [smem:[#allocation3]] %s0
  $region1: #{dice_embeddings.1} parent=0
    #allocation4 [shape = 'u8[32768]{0}', space=vmem, size = 0x8000, scoped, tag = 'output window, operand 0']
    loop: start=0, step=1, limit=4
    $region2: #{dice_embeddings.1} parent=1 // loop_pre_header
      _
    $region3: #{dice_embeddings.1} parent=1 // loop_header
      %s12 = sphi 0, %s16
      %p13 = scmp.ge.s32.totalorder %s12, 4
      %s22 = sphi 0, %s24
      %s25 = sphi 0, %s22
      %s26 = sphi 0, %s25
      %s42 = sphi 0, %s26
      %s48 = sphi 0, %s50
      %s51 = sphi 0, %s48
      %s52 = sphi 0, %s51
      %s68 = sphi 0, %s52
      %s74 = sphi 0, %s76
      %s77 = sphi 0, %s74
      %s78 = sphi 0, %s77
      %s94 = sphi 0, %s78
      %s100 = sphi 0, %s102
      %s103 = sphi 0, %s100
      %s104 = sphi 0, %s103
      %s120 = sphi 0, %s104
      %s126 = sphi 0, %s128
      %s129 = sphi 0, %s126
      %s130 = sphi 0, %s129
      %s146 = sphi 0, %s130
    $region4: #{dice_embeddings.1} parent=1 // loop_header_branch
      %15 = sbr.rel (%p13) target = $region8
    $region5: #{dice_embeddings.1} parent=1 // loop_body
      %s17 = ssub.s32 %s12, 1
      %s18 = ssub.s32 %s12, 2
      %s19 = sadd.s32 %s12, 1
      %s20 = ssub.s32 %s12, %s19
      %p21 = scmp.eq.s32.totalorder %s20, 0
      %s23 = sadd.s32 %s22, 1
      %s24 = scalar_select %p21, %s22, %s23
      %p27 = pneg %p21
      %p28 = scmp.eq.s32.totalorder %s12, 1
      %p29 = por %p27, %p28
      %p30 = scmp.ne.s32.totalorder %s22, %s25
      %p31 = scmp.eq.s32.totalorder %s12, 0
      %p32 = por %p30, %p31
      %p33 = scmp.ne.s32.totalorder %s22, %s25
      %p34 = scmp.eq.s32.totalorder %s17, 1
      %p35 = por %p33, %p34
      %p36 = scmp.ne.s32.totalorder %s25, %s26
      %p37 = scmp.eq.s32.totalorder %s17, 0
      %p38 = por %p36, %p37
      %p39 = scmp.ne.s32.totalorder %s25, %s26
      %p40 = scmp.eq.s32.totalorder %s18, 1
      %p41 = por %p39, %p40
      %p43 = scmp.ne.s32.totalorder %s26, %s42
      %p44 = scmp.eq.s32.totalorder %s18, 0
      %p45 = por %p43, %p44
      %s46 = ssub.s32 %s12, %s19
      %p47 = scmp.eq.s32.totalorder %s46, 0
      %s49 = sadd.s32 %s48, 1
      %s50 = scalar_select %p47, %s48, %s49
      %p53 = pneg %p47
      %p54 = scmp.eq.s32.totalorder %s12, 1
      %p55 = por %p53, %p54
      %p56 = scmp.ne.s32.totalorder %s48, %s51
      %p57 = scmp.eq.s32.totalorder %s12, 0
      %p58 = por %p56, %p57
      %p59 = scmp.ne.s32.totalorder %s48, %s51
      %p60 = scmp.eq.s32.totalorder %s17, 1
      %p61 = por %p59, %p60
      %p62 = scmp.ne.s32.totalorder %s51, %s52
      %p63 = scmp.eq.s32.totalorder %s17, 0
      %p64 = por %p62, %p63
      %p65 = scmp.ne.s32.totalorder %s51, %s52
      %p66 = scmp.eq.s32.totalorder %s18, 1
      %p67 = por %p65, %p66
      %p69 = scmp.ne.s32.totalorder %s52, %s68
      %p70 = scmp.eq.s32.totalorder %s18, 0
      %p71 = por %p69, %p70
      %s72 = ssub.s32 %s12, %s19
      %p73 = scmp.eq.s32.totalorder %s72, 0
      %s75 = sadd.s32 %s74, 1
      %s76 = scalar_select %p73, %s74, %s75
      %p79 = pneg %p73
      %p80 = scmp.eq.s32.totalorder %s12, 1
      %p81 = por %p79, %p80
      %p82 = scmp.ne.s32.totalorder %s74, %s77
      %p83 = scmp.eq.s32.totalorder %s12, 0
      %p84 = por %p82, %p83
      %p85 = scmp.ne.s32.totalorder %s74, %s77
      %p86 = scmp.eq.s32.totalorder %s17, 1
      %p87 = por %p85, %p86
      %p88 = scmp.ne.s32.totalorder %s77, %s78
      %p89 = scmp.eq.s32.totalorder %s17, 0
      %p90 = por %p88, %p89
      %p91 = scmp.ne.s32.totalorder %s77, %s78
      %p92 = scmp.eq.s32.totalorder %s18, 1
      %p93 = por %p91, %p92
      %p95 = scmp.ne.s32.totalorder %s78, %s94
      %p96 = scmp.eq.s32.totalorder %s18, 0
      %p97 = por %p95, %p96
      %s98 = ssub.s32 %s12, %s19
      %p99 = scmp.eq.s32.totalorder %s98, 0
      %s101 = sadd.s32 %s100, 1
      %s102 = scalar_select %p99, %s100, %s101
      %p105 = pneg %p99
      %p106 = scmp.eq.s32.totalorder %s12, 1
      %p107 = por %p105, %p106
      %p108 = scmp.ne.s32.totalorder %s100, %s103
      %p109 = scmp.eq.s32.totalorder %s12, 0
      %p110 = por %p108, %p109
      %p111 = scmp.ne.s32.totalorder %s100, %s103
      %p112 = scmp.eq.s32.totalorder %s17, 1
      %p113 = por %p111, %p112
      %p114 = scmp.ne.s32.totalorder %s103, %s104
      %p115 = scmp.eq.s32.totalorder %s17, 0
      %p116 = por %p114, %p115
      %p117 = scmp.ne.s32.totalorder %s103, %s104
      %p118 = scmp.eq.s32.totalorder %s18, 1
      %p119 = por %p117, %p118
      %p121 = scmp.ne.s32.totalorder %s104, %s120
      %p122 = scmp.eq.s32.totalorder %s18, 0
      %p123 = por %p121, %p122
      %s124 = ssub.s32 %s12, %s19
      %p125 = scmp.eq.s32.totalorder %s124, 0
      %s127 = sadd.s32 %s126, 1
      %s128 = scalar_select %p125, %s126, %s127
      %p131 = pneg %p125
      %p132 = scmp.eq.s32.totalorder %s12, 1
      %p133 = por %p131, %p132
      %p134 = scmp.ne.s32.totalorder %s126, %s129
      %p135 = scmp.eq.s32.totalorder %s12, 0
      %p136 = por %p134, %p135
      %p137 = scmp.ne.s32.totalorder %s126, %s129
      %p138 = scmp.eq.s32.totalorder %s17, 1
      %p139 = por %p137, %p138
      %p140 = scmp.ne.s32.totalorder %s129, %s130
      %p141 = scmp.eq.s32.totalorder %s17, 0
      %p142 = por %p140, %p141
      %p143 = scmp.ne.s32.totalorder %s129, %s130
      %p144 = scmp.eq.s32.totalorder %s18, 1
      %p145 = por %p143, %p144
      %p147 = scmp.ne.s32.totalorder %s130, %s146
      %p148 = scmp.eq.s32.totalorder %s18, 0
      %p149 = por %p147, %p148
      %p150 = scmp.le.s32.totalorder 1, %s12
      %p151 = scmp.lt.s32.totalorder %s12, 3
      %p152 = pnand %p150, %p151
      %p153 = pneg %p152
      // Predicated region
      $region9: #{dice_embeddings.1} parent=5 // pred_check
        _
      $region10: #{dice_embeddings.1} parent=5 // pred_check_branch
        %155 = sbr.rel (%p152) target = $region12
      $region11: #{dice_embeddings.1} parent=5 // pred_region
        %s156 = ssub.s32 %s12, 1
      $region12: #{dice_embeddings.1} parent=5 // pred_fallthru
        _
      %p157 = scmp.lt.s32.totalorder %s12, 2
      // Predicated region
      $region13: #{dice_embeddings.1} parent=5 // pred_check
        %p158 = pneg %p157
      $region14: #{dice_embeddings.1} parent=5 // pred_check_branch
        %160 = sbr.rel (%p158) target = $region16
      $region15: #{dice_embeddings.1} parent=5 // pred_region
        // Predicated region
        $region17: #{dice_embeddings.1} parent=15 // pred_check
          %p161 = pneg %p32
        $region18: #{dice_embeddings.1} parent=15 // pred_check_branch
          %163 = sbr.rel (%p161) target = $region20
        $region19: #{dice_embeddings.1} parent=15 // pred_region
          %p164 = scmp.lt.s32.totalorder %s12, 1
          %s165 = scalar_select %p164, %s12, 1
          %s166 = smul.addr %s165, 4
          %s167 = smul.addr %s166, 8
          %s168 = scalar_lea.vmem %s1, %s167
        $region20: #{dice_embeddings.1} parent=15 // pred_fallthru
          _
        // Predicated region
        $region21: #{dice_embeddings.1} parent=15 // pred_check
          %p169 = pneg %p58
        $region22: #{dice_embeddings.1} parent=15 // pred_check_branch
          %171 = sbr.rel (%p169) target = $region24
        $region23: #{dice_embeddings.1} parent=15 // pred_region
          %p172 = scmp.lt.s32.totalorder %s12, 1
          %s173 = scalar_select %p172, %s12, 1
          %s174 = scalar_lea.vmem %s2, %s173
        $region24: #{dice_embeddings.1} parent=15 // pred_fallthru
          _
        // Predicated region
        $region25: #{dice_embeddings.1} parent=15 // pred_check
          %p175 = pneg %p84
        $region26: #{dice_embeddings.1} parent=15 // pred_check_branch
          %177 = sbr.rel (%p175) target = $region28
        $region27: #{dice_embeddings.1} parent=15 // pred_region
          %p178 = scmp.lt.s32.totalorder %s12, 1
          %s179 = scalar_select %p178, %s12, 1
          %s180 = scalar_lea.vmem %s3, %s179
        $region28: #{dice_embeddings.1} parent=15 // pred_fallthru
          _
        // Predicated region
        $region29: #{dice_embeddings.1} parent=15 // pred_check
          %p181 = pneg %p110
        $region30: #{dice_embeddings.1} parent=15 // pred_check_branch
          %183 = sbr.rel (%p181) target = $region32
        $region31: #{dice_embeddings.1} parent=15 // pred_region
          %p184 = scmp.lt.s32.totalorder %s12, 1
          %s185 = scalar_select %p184, %s12, 1
          %s186 = smul.addr %s185, 16
          %s187 = smul.addr %s186, 8
          %s188 = scalar_lea.vmem %s4, %s187
        $region32: #{dice_embeddings.1} parent=15 // pred_fallthru
          _
      $region16: #{dice_embeddings.1} parent=5 // pred_fallthru
        _
      %p189 = scmp.le.s32.totalorder 1, %s12
      %p190 = scmp.lt.s32.totalorder %s12, 3
      %p191 = pnand %p189, %p190
      %p192 = pneg %p191
      // Predicated region
      $region33: #{dice_embeddings.1} parent=5 // pred_check
        _
      $region34: #{dice_embeddings.1} parent=5 // pred_check_branch
        %194 = sbr.rel (%p191) target = $region36
      $region35: #{dice_embeddings.1} parent=5 // pred_region
        %s195 = ssub.s32 %s12, 1
        %p196 = scmp.lt.s32.totalorder %s17, 1
        %s197 = scalar_select %p196, %s17, 1
        %s198 = smul.addr %s197, 4
        %s199 = smul.addr %s198, 8
        %s200 = scalar_lea.vmem %s1, %s199
        %p201 = pneg %p38
        %p202 = pneg %p35
        %p203 = scmp.lt.s32.totalorder %s17, 1
        %s204 = scalar_select %p203, %s17, 1
        %s205 = scalar_lea.vmem %s2, %s204
        %p206 = pneg %p64
        %p207 = pneg %p61
        %p208 = scmp.lt.s32.totalorder %s17, 1
        %s209 = scalar_select %p208, %s17, 1
        %s210 = scalar_lea.vmem %s3, %s209
        %p211 = pneg %p90
        %p212 = pneg %p87
        %p213 = scmp.lt.s32.totalorder %s17, 1
        %s214 = scalar_select %p213, %s17, 1
        %s215 = smul.addr %s214, 16
        %s216 = smul.addr %s215, 8
        %s217 = scalar_lea.vmem %s4, %s216
        %p218 = pneg %p116
        %p219 = pneg %p113
        %p220 = pneg %p142
        %p221 = pneg %p139
        %s222 = sand.u32 %s129, 1
        %s223 = sand.u32 %s129, 1
        %s224 = smul.addr %s223, 32
        %s225 = scalar_lea.vmem [#allocation4], %s224
        %p226 = scmp.lt.s32.totalorder %s17, 1
        %s227 = scalar_select %p226, %s17, 1
        %s228 = smul.addr %s227, 4
        %s229 = smul.addr %s228, 8
        %s230 = scalar_lea.vmem %s1, %s229
        %p231 = scmp.lt.s32.totalorder %s17, 1
        %s232 = scalar_select %p231, %s17, 1
        %s233 = scalar_lea.vmem %s2, %s232
        %p234 = scmp.lt.s32.totalorder %s17, 1
        %s235 = scalar_select %p234, %s17, 1
        %s236 = scalar_lea.vmem %s3, %s235
        %p237 = scmp.lt.s32.totalorder %s17, 1
        %s238 = scalar_select %p237, %s17, 1
        %s239 = smul.addr %s238, 16
        %s240 = smul.addr %s239, 8
        %s241 = scalar_lea.vmem %s4, %s240
        %v242 = vld [vmem:[%s230] sm:$0xff]
        %v243 = vld [vmem:[%s230 + $0x8] sm:$0xff]
        %v244 = vld [vmem:[%s230 + $0x10] sm:$0xff]
        %v245 = vld [vmem:[%s230 + $0x18] sm:$0xff]
        %v246 = vld [vmem:[%s233] sm:$0x1]
        %v247 = vld [vmem:[%s236] sm:$0x1]
        %v249 = vlaneseq
        %v250 = vshrl.u32 %v249, 7
        %v251 = vsub.s32 0, %v250
        %v252 = vrot.slane %v246, %v251
        %v254 = vsub.f32 %v242, %v252
        %v255 = vsub.f32 %v243, %v252
        %v256 = vsub.f32 %v244, %v252
        %v257 = vsub.f32 %v245, %v252
        %v258 = vsub.f32 %v247, %v246
        %v260 = vlaneseq
        %v261 = vshrl.u32 %v260, 7
        %v262 = vsub.s32 0, %v261
        %v263 = vrot.slane %v258, %v262
        %v265 = vrcp.pop %v263
        %v266 = vmul.f32 %v254, %v265
        %v267 = vmul.f32 %v255, %v265
        %v268 = vmul.f32 %v256, %v265
        %v269 = vmul.f32 %v257, %v265
        %vm270 = vcmp.ge.f32.partialorder %v266, 0.0
        %vm271 = vcmp.ge.f32.partialorder %v267, 0.0
        %vm272 = vcmp.ge.f32.partialorder %v268, 0.0
        %vm273 = vcmp.ge.f32.partialorder %v269, 0.0
        %vm274 = vcmp.le.f32.partialorder %v266, 1.0
        %vm275 = vcmp.le.f32.partialorder %v267, 1.0
        %vm276 = vcmp.le.f32.partialorder %v268, 1.0
        %vm277 = vcmp.le.f32.partialorder %v269, 1.0
        %vm278 = vmand %vm270, %vm274
        %vm279 = vmand %vm271, %vm275
        %vm280 = vmand %vm272, %vm276
        %vm281 = vmand %vm273, %vm277
        %v282 = vlaneseq
        %v283 = vand.u32 %v282, 127
        %v284 = vlaneseq
        %v285 = vshrl.u32 %v284, 7
        %v286 = vadd.s32 %v285, 8
        %v287 = vadd.s32 %v285, 16
        %v288 = vadd.s32 %v285, 24
        %s289 = sld [smem:[#allocation3]]
        %s290 = scvt.s32.f32 %s289
        %s291 = smul.u32 %s17, 16
        %s292 = scvt.s32.f32 %s291
        %v293 = vcvt.s32.f32 %v283
        %v294 = vstv %s292
        %v295 = vadd.f32 %v293, %v294
        %v296 = vmul.f32 %v295, 78.233
        %v297 = vcvt.s32.f32 %v285
        %v298 = vcvt.s32.f32 %v286
        %v299 = vcvt.s32.f32 %v287
        %v300 = vcvt.s32.f32 %v288
        %v301 = vmul.f32 %v297, 12.9898
        %v302 = vmul.f32 %v298, 12.9898
        %v303 = vmul.f32 %v299, 12.9898
        %v304 = vmul.f32 %v300, 12.9898
        %v305 = vadd.f32 %v296, %v301
        %v306 = vadd.f32 %v296, %v302
        %v307 = vadd.f32 %v296, %v303
        %v308 = vadd.f32 %v296, %v304
        %s309 = smul.f32 %s290, 0.618034
        %v310 = vstv %s309
        %v311 = vadd.f32 %v305, %v310
        %v312 = vadd.f32 %v306, %v310
        %v313 = vadd.f32 %v307, %v310
        %v314 = vadd.f32 %v308, %v310
        %v315 = vadd.f32 %v311, 0.5
        %v316 = vadd.f32 %v312, 0.5
        %v317 = vadd.f32 %v313, 0.5
        %v318 = vadd.f32 %v314, 0.5
        %v319 = vand.u32 2147483647, %v315
        %vm320 = vcmp.le.f32.partialorder %v319, 0.7853982
        %vm321 = vcmp.lt.s32.totalorder %v315, 0
        %v322 = vand.u32 %v315, 2139095040
        %v323 = vshrl.u32 %v322, 23
        %v324 = vsub.s32 %v323, 127
        %v325 = vand.u32 2147483647, %v315
        %v326 = vand.u32 %v325, 8388607
        %v327 = vor.u32 %v326, 8388608
        %v328 = vsub.s32 0, %v327
        %v329 = vadd.s32 %v324, 1
        %vm330 = vcmp.gt.s32.totalorder %v329, 0
        %v331 = vsel %vm330, %v329, 0
        %v332 = vshrl.u32 %v331, 5
        %v333 = vand.u32 %v331, 31
        %v334 = vsub.s32 32, %v333
        %v335 = vshrl.u32 683565275, %v334
        %v336 = vshll.u32 683565275, %v333
        %v337 = vshrl.u32 2475754826, %v334
        %v338 = vor.u32 %v336, %v337
        %v339 = vshll.u32 2475754826, %v333
        %v340 = vshrl.u32 2131351028, %v334
        %v341 = vor.u32 %v339, %v340
        %v342 = vshll.u32 2131351028, %v333
        %v343 = vshrl.u32 2102212464, %v334
        %v344 = vor.u32 %v342, %v343
        %v345 = vshll.u32 2102212464, %v333
        %v346 = vshrl.u32 920167782, %v334
        %v347 = vor.u32 %v345, %v346
        %v348 = vshll.u32 920167782, %v333
        %v349 = vshrl.u32 1326507024, %v334
        %v350 = vor.u32 %v348, %v349
        %vm351 = vcmp.lt.s32.totalorder %v332, 1
        %vm352 = vcmp.lt.s32.totalorder %v332, 2
        %vm353 = vcmp.lt.s32.totalorder %v332, 3
        %vm354 = vcmp.lt.s32.totalorder %v332, 4
        %v355 = vsel %vm351, %v335, %v338
        %v356 = vsel %vm354, %v344, 2102212464
        %v357 = vsel %vm353, %v341, %v356
        %v358 = vsel %vm352, %v355, %v357
        %v359 = vsel %vm351, %v338, %v341
        %v360 = vsel %vm354, %v347, 920167782
        %v361 = vsel %vm353, %v344, %v360
        %v362 = vsel %vm352, %v359, %v361
        %v363 = vsel %vm351, %v341, %v344
        %v364 = vsel %vm354, %v350, 1326507024
        %v365 = vsel %vm353, %v347, %v364
        %v366 = vsel %vm352, %v363, %v365
        %v367 = vshll.u32 %v327, 8
        %v368 = vmul.u32.u64.compose %v367, %v366
        %v369 = vextract.low.u32 %v368
        %v370 = vextract.high.u32 %v368
        %v371 = vmul.u32.u64.compose %v367, %v362
        %v372 = vextract.low.u32 %v371
        %v373 = vextract.high.u32 %v371
        %v374 = vmul.u32 %v367, %v358
        %v375 = vadd.s32 %v370, %v372
        %vm376 = vc.u32 %v370, %v372
        %v377 = vadd.s32 %v373, 1
        %v378 = vsel %vm376, %v377, %v373
        %v379 = vadd.s32 %v374, %v378
        %v380 = vadd.s32 %v379, 536870912
        %v381 = vshrl.u32 %v380, 30
        %v382 = vshll.u32 %v381, 30
        %v383 = vsub.s32 %v379, %v382
        %vm384 = vcmp.lt.s32.totalorder %v383, 0
        %v385 = vsub.s32 0, %v383
        %v386 = vsel %vm384, %v385, %v383
        %v387 = vclz %v386
        %v388 = vsub.s32 %v387, 2
        %vm389 = vcmp.gt.s32.totalorder 0, %v388
        %v390 = vsel %vm389, 0, %v388
        %v391 = vsub.s32 32, %v390
        %v392 = vshll.u32 %v383, %v390
        %v393 = vshrl.u32 %v375, %v391
        %v394 = vor.u32 %v392, %v393
        %v395 = vsub.s32 4294967266, %v390
        %v396 = vadd.s32 %v395, 127
        %v397 = vshll.u32 %v396, 23
        %v398 = vor.u32 4788187, %v397
        %v399 = vand.u32 2147483647, %v398
        %v401 = vcvt.s32.f32 %v394
        %v402 = vmul.f32 %v401, %v399
        %v403 = vxor.u32 %v402, 2147483648
        %v404 = vsel %vm321, %v403, %v402
        %v405 = vsub.s32 4, %v381
        %v406 = vsel %vm321, %v405, %v381
        %v407 = vsel %vm320, %v315, %v404
        %v408 = vsel %vm320, 0, %v406
        %v409 = vcosq.f32.pop %v407
        %v410 = vsinq.f32.pop %v407
        %vm411 = vweird.f32 %v315
        %v412 = vadd.s32 %v408, 3
        %v413 = vand.u32 %v412, 3
        %vm414 = vcmp.lt.s32.totalorder %v413, 2
        %vm415 = vcmp.eq.s32.totalorder %v413, 0
        %v416 = vxor.u32 %v410, 2147483648
        %v417 = vsel %vm415, %v409, %v416
        %vm418 = vcmp.eq.s32.totalorder %v413, 2
        %v419 = vxor.u32 %v409, 2147483648
        %v420 = vsel %vm418, %v419, %v410
        %v421 = vsel %vm414, %v417, %v420
        %v422 = vsel %vm411, nan, %v421
        %v423 = vand.u32 2147483647, %v316
        %vm424 = vcmp.le.f32.partialorder %v423, 0.7853982
        %vm425 = vcmp.lt.s32.totalorder %v316, 0
        %v426 = vand.u32 %v316, 2139095040
        %v427 = vshrl.u32 %v426, 23
        %v428 = vsub.s32 %v427, 127
        %v429 = vand.u32 2147483647, %v316
        %v430 = vand.u32 %v429, 8388607
        %v431 = vor.u32 %v430, 8388608
        %v432 = vsub.s32 0, %v431
        %v433 = vadd.s32 %v428, 1
        %vm434 = vcmp.gt.s32.totalorder %v433, 0
        %v435 = vsel %vm434, %v433, 0
        %v436 = vshrl.u32 %v435, 5
        %v437 = vand.u32 %v435, 31
        %v438 = vsub.s32 32, %v437
        %v439 = vshrl.u32 683565275, %v438
        %v440 = vshll.u32 683565275, %v437
        %v441 = vshrl.u32 2475754826, %v438
        %v442 = vor.u32 %v440, %v441
        %v443 = vshll.u32 2475754826, %v437
        %v444 = vshrl.u32 2131351028, %v438
        %v445 = vor.u32 %v443, %v444
        %v446 = vshll.u32 2131351028, %v437
        %v447 = vshrl.u32 2102212464, %v438
        %v448 = vor.u32 %v446, %v447
        %v449 = vshll.u32 2102212464, %v437
        %v450 = vshrl.u32 920167782, %v438
        %v451 = vor.u32 %v449, %v450
        %v452 = vshll.u32 920167782, %v437
        %v453 = vshrl.u32 1326507024, %v438
        %v454 = vor.u32 %v452, %v453
        %vm455 = vcmp.lt.s32.totalorder %v436, 1
        %vm456 = vcmp.lt.s32.totalorder %v436, 2
        %vm457 = vcmp.lt.s32.totalorder %v436, 3
        %vm458 = vcmp.lt.s32.totalorder %v436, 4
        %v459 = vsel %vm455, %v439, %v442
        %v460 = vsel %vm458, %v448, 2102212464
        %v461 = vsel %vm457, %v445, %v460
        %v462 = vsel %vm456, %v459, %v461
        %v463 = vsel %vm455, %v442, %v445
        %v464 = vsel %vm458, %v451, 920167782
        %v465 = vsel %vm457, %v448, %v464
        %v466 = vsel %vm456, %v463, %v465
        %v467 = vsel %vm455, %v445, %v448
        %v468 = vsel %vm458, %v454, 1326507024
        %v469 = vsel %vm457, %v451, %v468
        %v470 = vsel %vm456, %v467, %v469
        %v471 = vshll.u32 %v431, 8
        %v472 = vmul.u32.u64.compose %v471, %v470
        %v473 = vextract.low.u32 %v472
        %v474 = vextract.high.u32 %v472
        %v475 = vmul.u32.u64.compose %v471, %v466
        %v476 = vextract.low.u32 %v475
        %v477 = vextract.high.u32 %v475
        %v478 = vmul.u32 %v471, %v462
        %v479 = vadd.s32 %v474, %v476
        %vm480 = vc.u32 %v474, %v476
        %v481 = vadd.s32 %v477, 1
        %v482 = vsel %vm480, %v481, %v477
        %v483 = vadd.s32 %v478, %v482
        %v484 = vadd.s32 %v483, 536870912
        %v485 = vshrl.u32 %v484, 30
        %v486 = vshll.u32 %v485, 30
        %v487 = vsub.s32 %v483, %v486
        %vm488 = vcmp.lt.s32.totalorder %v487, 0
        %v489 = vsub.s32 0, %v487
        %v490 = vsel %vm488, %v489, %v487
        %v491 = vclz %v490
        %v492 = vsub.s32 %v491, 2
        %vm493 = vcmp.gt.s32.totalorder 0, %v492
        %v494 = vsel %vm493, 0, %v492
        %v495 = vsub.s32 32, %v494
        %v496 = vshll.u32 %v487, %v494
        %v497 = vshrl.u32 %v479, %v495
        %v498 = vor.u32 %v496, %v497
        %v499 = vsub.s32 4294967266, %v494
        %v500 = vadd.s32 %v499, 127
        %v501 = vshll.u32 %v500, 23
        %v502 = vor.u32 4788187, %v501
        %v503 = vand.u32 2147483647, %v502
        %v505 = vcvt.s32.f32 %v498
        %v506 = vmul.f32 %v505, %v503
        %v507 = vxor.u32 %v506, 2147483648
        %v508 = vsel %vm425, %v507, %v506
        %v509 = vsub.s32 4, %v485
        %v510 = vsel %vm425, %v509, %v485
        %v511 = vsel %vm424, %v316, %v508
        %v512 = vsel %vm424, 0, %v510
        %v513 = vcosq.f32.pop %v511
        %v514 = vsinq.f32.pop %v511
        %vm515 = vweird.f32 %v316
        %v516 = vadd.s32 %v512, 3
        %v517 = vand.u32 %v516, 3
        %vm518 = vcmp.lt.s32.totalorder %v517, 2
        %vm519 = vcmp.eq.s32.totalorder %v517, 0
        %v520 = vxor.u32 %v514, 2147483648
        %v521 = vsel %vm519, %v513, %v520
        %vm522 = vcmp.eq.s32.totalorder %v517, 2
        %v523 = vxor.u32 %v513, 2147483648
        %v524 = vsel %vm522, %v523, %v514
        %v525 = vsel %vm518, %v521, %v524
        %v526 = vsel %vm515, nan, %v525
        %v527 = vand.u32 2147483647, %v317
        %vm528 = vcmp.le.f32.partialorder %v527, 0.7853982
        %vm529 = vcmp.lt.s32.totalorder %v317, 0
        %v530 = vand.u32 %v317, 2139095040
        %v531 = vshrl.u32 %v530, 23
        %v532 = vsub.s32 %v531, 127
        %v533 = vand.u32 2147483647, %v317
        %v534 = vand.u32 %v533, 8388607
        %v535 = vor.u32 %v534, 8388608
        %v536 = vsub.s32 0, %v535
        %v537 = vadd.s32 %v532, 1
        %vm538 = vcmp.gt.s32.totalorder %v537, 0
        %v539 = vsel %vm538, %v537, 0
        %v540 = vshrl.u32 %v539, 5
        %v541 = vand.u32 %v539, 31
        %v542 = vsub.s32 32, %v541
        %v543 = vshrl.u32 683565275, %v542
        %v544 = vshll.u32 683565275, %v541
        %v545 = vshrl.u32 2475754826, %v542
        %v546 = vor.u32 %v544, %v545
        %v547 = vshll.u32 2475754826, %v541
        %v548 = vshrl.u32 2131351028, %v542
        %v549 = vor.u32 %v547, %v548
        %v550 = vshll.u32 2131351028, %v541
        %v551 = vshrl.u32 2102212464, %v542
        %v552 = vor.u32 %v550, %v551
        %v553 = vshll.u32 2102212464, %v541
        %v554 = vshrl.u32 920167782, %v542
        %v555 = vor.u32 %v553, %v554
        %v556 = vshll.u32 920167782, %v541
        %v557 = vshrl.u32 1326507024, %v542
        %v558 = vor.u32 %v556, %v557
        %vm559 = vcmp.lt.s32.totalorder %v540, 1
        %vm560 = vcmp.lt.s32.totalorder %v540, 2
        %vm561 = vcmp.lt.s32.totalorder %v540, 3
        %vm562 = vcmp.lt.s32.totalorder %v540, 4
        %v563 = vsel %vm559, %v543, %v546
        %v564 = vsel %vm562, %v552, 2102212464
        %v565 = vsel %vm561, %v549, %v564
        %v566 = vsel %vm560, %v563, %v565
        %v567 = vsel %vm559, %v546, %v549
        %v568 = vsel %vm562, %v555, 920167782
        %v569 = vsel %vm561, %v552, %v568
        %v570 = vsel %vm560, %v567, %v569
        %v571 = vsel %vm559, %v549, %v552
        %v572 = vsel %vm562, %v558, 1326507024
        %v573 = vsel %vm561, %v555, %v572
        %v574 = vsel %vm560, %v571, %v573
        %v575 = vshll.u32 %v535, 8
        %v576 = vmul.u32.u64.compose %v575, %v574
        %v577 = vextract.low.u32 %v576
        %v578 = vextract.high.u32 %v576
        %v579 = vmul.u32.u64.compose %v575, %v570
        %v580 = vextract.low.u32 %v579
        %v581 = vextract.high.u32 %v579
        %v582 = vmul.u32 %v575, %v566
        %v583 = vadd.s32 %v578, %v580
        %vm584 = vc.u32 %v578, %v580
        %v585 = vadd.s32 %v581, 1
        %v586 = vsel %vm584, %v585, %v581
        %v587 = vadd.s32 %v582, %v586
        %v588 = vadd.s32 %v587, 536870912
        %v589 = vshrl.u32 %v588, 30
        %v590 = vshll.u32 %v589, 30
        %v591 = vsub.s32 %v587, %v590
        %vm592 = vcmp.lt.s32.totalorder %v591, 0
        %v593 = vsub.s32 0, %v591
        %v594 = vsel %vm592, %v593, %v591
        %v595 = vclz %v594
        %v596 = vsub.s32 %v595, 2
        %vm597 = vcmp.gt.s32.totalorder 0, %v596
        %v598 = vsel %vm597, 0, %v596
        %v599 = vsub.s32 32, %v598
        %v600 = vshll.u32 %v591, %v598
        %v601 = vshrl.u32 %v583, %v599
        %v602 = vor.u32 %v600, %v601
        %v603 = vsub.s32 4294967266, %v598
        %v604 = vadd.s32 %v603, 127
        %v605 = vshll.u32 %v604, 23
        %v606 = vor.u32 4788187, %v605
        %v607 = vand.u32 2147483647, %v606
        %v609 = vcvt.s32.f32 %v602
        %v610 = vmul.f32 %v609, %v607
        %v611 = vxor.u32 %v610, 2147483648
        %v612 = vsel %vm529, %v611, %v610
        %v613 = vsub.s32 4, %v589
        %v614 = vsel %vm529, %v613, %v589
        %v615 = vsel %vm528, %v317, %v612
        %v616 = vsel %vm528, 0, %v614
        %v617 = vcosq.f32.pop %v615
        %v618 = vsinq.f32.pop %v615
        %vm619 = vweird.f32 %v317
        %v620 = vadd.s32 %v616, 3
        %v621 = vand.u32 %v620, 3
        %vm622 = vcmp.lt.s32.totalorder %v621, 2
        %vm623 = vcmp.eq.s32.totalorder %v621, 0
        %v624 = vxor.u32 %v618, 2147483648
        %v625 = vsel %vm623, %v617, %v624
        %vm626 = vcmp.eq.s32.totalorder %v621, 2
        %v627 = vxor.u32 %v617, 2147483648
        %v628 = vsel %vm626, %v627, %v618
        %v629 = vsel %vm622, %v625, %v628
        %v630 = vsel %vm619, nan, %v629
        %v631 = vand.u32 2147483647, %v318
        %vm632 = vcmp.le.f32.partialorder %v631, 0.7853982
        %vm633 = vcmp.lt.s32.totalorder %v318, 0
        %v634 = vand.u32 %v318, 2139095040
        %v635 = vshrl.u32 %v634, 23
        %v636 = vsub.s32 %v635, 127
        %v637 = vand.u32 2147483647, %v318
        %v638 = vand.u32 %v637, 8388607
        %v639 = vor.u32 %v638, 8388608
        %v640 = vsub.s32 0, %v639
        %v641 = vadd.s32 %v636, 1
        %vm642 = vcmp.gt.s32.totalorder %v641, 0
        %v643 = vsel %vm642, %v641, 0
        %v644 = vshrl.u32 %v643, 5
        %v645 = vand.u32 %v643, 31
        %v646 = vsub.s32 32, %v645
        %v647 = vshrl.u32 683565275, %v646
        %v648 = vshll.u32 683565275, %v645
        %v649 = vshrl.u32 2475754826, %v646
        %v650 = vor.u32 %v648, %v649
        %v651 = vshll.u32 2475754826, %v645
        %v652 = vshrl.u32 2131351028, %v646
        %v653 = vor.u32 %v651, %v652
        %v654 = vshll.u32 2131351028, %v645
        %v655 = vshrl.u32 2102212464, %v646
        %v656 = vor.u32 %v654, %v655
        %v657 = vshll.u32 2102212464, %v645
        %v658 = vshrl.u32 920167782, %v646
        %v659 = vor.u32 %v657, %v658
        %v660 = vshll.u32 920167782, %v645
        %v661 = vshrl.u32 1326507024, %v646
        %v662 = vor.u32 %v660, %v661
        %vm663 = vcmp.lt.s32.totalorder %v644, 1
        %vm664 = vcmp.lt.s32.totalorder %v644, 2
        %vm665 = vcmp.lt.s32.totalorder %v644, 3
        %vm666 = vcmp.lt.s32.totalorder %v644, 4
        %v667 = vsel %vm663, %v647, %v650
        %v668 = vsel %vm666, %v656, 2102212464
        %v669 = vsel %vm665, %v653, %v668
        %v670 = vsel %vm664, %v667, %v669
        %v671 = vsel %vm663, %v650, %v653
        %v672 = vsel %vm666, %v659, 920167782
        %v673 = vsel %vm665, %v656, %v672
        %v674 = vsel %vm664, %v671, %v673
        %v675 = vsel %vm663, %v653, %v656
        %v676 = vsel %vm666, %v662, 1326507024
        %v677 = vsel %vm665, %v659, %v676
        %v678 = vsel %vm664, %v675, %v677
        %v679 = vshll.u32 %v639, 8
        %v680 = vmul.u32.u64.compose %v679, %v678
        %v681 = vextract.low.u32 %v680
        %v682 = vextract.high.u32 %v680
        %v683 = vmul.u32.u64.compose %v679, %v674
        %v684 = vextract.low.u32 %v683
        %v685 = vextract.high.u32 %v683
        %v686 = vmul.u32 %v679, %v670
        %v687 = vadd.s32 %v682, %v684
        %vm688 = vc.u32 %v682, %v684
        %v689 = vadd.s32 %v685, 1
        %v690 = vsel %vm688, %v689, %v685
        %v691 = vadd.s32 %v686, %v690
        %v692 = vadd.s32 %v691, 536870912
        %v693 = vshrl.u32 %v692, 30
        %v694 = vshll.u32 %v693, 30
        %v695 = vsub.s32 %v691, %v694
        %vm696 = vcmp.lt.s32.totalorder %v695, 0
        %v697 = vsub.s32 0, %v695
        %v698 = vsel %vm696, %v697, %v695
        %v699 = vclz %v698
        %v700 = vsub.s32 %v699, 2
        %vm701 = vcmp.gt.s32.totalorder 0, %v700
        %v702 = vsel %vm701, 0, %v700
        %v703 = vsub.s32 32, %v702
        %v704 = vshll.u32 %v695, %v702
        %v705 = vshrl.u32 %v687, %v703
        %v706 = vor.u32 %v704, %v705
        %v707 = vsub.s32 4294967266, %v702
        %v708 = vadd.s32 %v707, 127
        %v709 = vshll.u32 %v708, 23
        %v710 = vor.u32 4788187, %v709
        %v711 = vand.u32 2147483647, %v710
        %v713 = vcvt.s32.f32 %v706
        %v714 = vmul.f32 %v713, %v711
        %v715 = vxor.u32 %v714, 2147483648
        %v716 = vsel %vm633, %v715, %v714
        %v717 = vsub.s32 4, %v693
        %v718 = vsel %vm633, %v717, %v693
        %v719 = vsel %vm632, %v318, %v716
        %v720 = vsel %vm632, 0, %v718
        %v721 = vcosq.f32.pop %v719
        %v722 = vsinq.f32.pop %v719
        %vm723 = vweird.f32 %v318
        %v724 = vadd.s32 %v720, 3
        %v725 = vand.u32 %v724, 3
        %vm726 = vcmp.lt.s32.totalorder %v725, 2
        %vm727 = vcmp.eq.s32.totalorder %v725, 0
        %v728 = vxor.u32 %v722, 2147483648
        %v729 = vsel %vm727, %v721, %v728
        %vm730 = vcmp.eq.s32.totalorder %v725, 2
        %v731 = vxor.u32 %v721, 2147483648
        %v732 = vsel %vm730, %v731, %v722
        %v733 = vsel %vm726, %v729, %v732
        %v734 = vsel %vm723, nan, %v733
        %v735 = vmul.f32 %v422, 43758.547
        %v736 = vmul.f32 %v526, 43758.547
        %v737 = vmul.f32 %v630, 43758.547
        %v738 = vmul.f32 %v734, 43758.547
        %v739 = vfloor.f32 %v735
        %v740 = vfloor.f32 %v736
        %v741 = vfloor.f32 %v737
        %v742 = vfloor.f32 %v738
        %v743 = vsub.f32 %v735, %v739
        %v744 = vsub.f32 %v736, %v740
        %v745 = vsub.f32 %v737, %v741
        %v746 = vsub.f32 %v738, %v742
        %v747 = vmul.f32 %v743, 2.0
        %v748 = vmul.f32 %v744, 2.0
        %v749 = vmul.f32 %v745, 2.0
        %v750 = vmul.f32 %v746, 2.0
        %v751 = vsub.f32 %v747, 1.0
        %v752 = vsub.f32 %v748, 1.0
        %v753 = vsub.f32 %v749, 1.0
        %v754 = vsub.f32 %v750, 1.0
        %v755 = vmul.f32 %v751, 3.1415927
        %v756 = vmul.f32 %v752, 3.1415927
        %v757 = vmul.f32 %v753, 3.1415927
        %v758 = vmul.f32 %v754, 3.1415927
        %v759 = vmul.f32 %v266, 3.1415927
        %v760 = vmul.f32 %v267, 3.1415927
        %v761 = vmul.f32 %v268, 3.1415927
        %v762 = vmul.f32 %v269, 3.1415927
        %v763 = vsel %vm278, %v759, %v755
        %v764 = vsel %vm279, %v760, %v756
        %v765 = vsel %vm280, %v761, %v757
        %v766 = vsel %vm281, %v762, %v758
        %v767 = vmul.u32 %v285, 8
        %v768 = vmul.u32 %v286, 8
        %vm769 = vcmp.ge.s32.totalorder %v283, %v767
        %vm770 = vcmp.ge.s32.totalorder %v283, %v768
        %v771 = vadd.s32 %v285, 1
        %v772 = vadd.s32 %v286, 1
        %v773 = vmul.u32 %v771, 8
        %v774 = vmul.u32 %v772, 8
        %vm775 = vcmp.lt.s32.totalorder %v283, %v773
        %vm776 = vcmp.lt.s32.totalorder %v283, %v774
        %vm777 = vmand %vm769, %vm775
        %vm778 = vmand %vm770, %vm776
        %v779 = vsel %vm777, 1, 0
        %v780 = vsel %vm778, 1, 0
        %v781 = vcvt.s32.f32 %v779
        %v782 = vcvt.s32.f32 %v780
        %vm783 = vcmask 130048
        %v785 = vsel %vm783, %v763, 0
        %v788 = vsel %vm783, %v764, 0
        %v791 = vsel %vm783, %v765, 0
        %v794 = vsel %vm783, %v766, 0
        %796 = vmatprep.subr.mxu0 0.0
        %797 = vmatpush1.msra.mxu0 %v781
        %798 = vmatprep.subr.mxu0 0.0
        %799 = vmatpush1.msra.mxu0 %v782
        %800 = vmatprep.subr.mxu0 0.0
        %801 = vmatpush1.msra.mxu0 0.0
        %802 = vmatprep.subr.mxu0 0.0
        %803 = vmatpush1.msra.mxu0 0.0
        %804 = vmatprep.subr.mxu0 0.0
        %805 = vmatpush1.msra.mxu0 0.0
        %806 = vmatprep.subr.mxu0 0.0
        %807 = vmatpush1.msra.mxu0 0.0
        %808 = vmatprep.subr.mxu0 0.0
        %809 = vmatpush1.msra.mxu0 0.0
        %810 = vmatprep.subr.mxu0 0.0
        %811 = vmatpush1.msra.mxu0 0.0
        %812 = vmatprep.subr.mxu0 0.0
        %813 = vmatpush1.msra.mxu0 0.0
        %814 = vmatprep.subr.mxu0 0.0
        %815 = vmatpush1.msra.mxu0 0.0
        %816 = vmatprep.subr.mxu0 0.0
        %817 = vmatpush1.msra.mxu0 0.0
        %818 = vmatprep.subr.mxu0 0.0
        %819 = vmatpush1.msra.mxu0 0.0
        %820 = vmatprep.subr.mxu0 0.0
        %821 = vmatpush1.msra.mxu0 0.0
        %822 = vmatprep.subr.mxu0 0.0
        %823 = vmatpush1.msra.mxu0 0.0
        %824 = vmatprep.subr.mxu0 0.0
        %825 = vmatpush1.msra.mxu0 0.0
        %826 = vmatprep.subr.mxu0 0.0
        %827 = vmatpush1.msra.mxu0 0.0
        %828 = vmatprep.subr.mxu0 0.0
        %829 = vmatpush1.msra.mxu0 0.0
        %830 = vmatprep.subr.mxu0 0.0
        %831 = vmatpush1.msra.mxu0 0.0
        %832 = vmatprep.subr.mxu0 0.0
        %833 = vmatpush1.msra.mxu0 0.0
        %834 = vmatprep.subr.mxu0 0.0
        %835 = vmatpush1.msra.mxu0 0.0
        %836 = vmatprep.subr.mxu0 0.0
        %837 = vmatpush1.msra.mxu0 0.0
        %838 = vmatprep.subr.mxu0 0.0
        %839 = vmatpush1.msra.mxu0 0.0
        %840 = vmatprep.subr.mxu0 0.0
        %841 = vmatpush1.msra.mxu0 0.0
        %842 = vmatprep.subr.mxu0 0.0
        %843 = vmatpush1.msra.mxu0 0.0
        %844 = vmatprep.subr.mxu0 0.0
        %845 = vmatpush1.msra.mxu0 0.0
        %846 = vmatprep.subr.mxu0 0.0
        %847 = vmatpush1.msra.mxu0 0.0
        %848 = vmatprep.subr.mxu0 0.0
        %849 = vmatpush1.msra.mxu0 0.0
        %850 = vmatprep.subr.mxu0 0.0
        %851 = vmatpush1.msra.mxu0 0.0
        %852 = vmatprep.subr.mxu0 0.0
        %853 = vmatpush1.msra.mxu0 0.0
        %854 = vmatprep.subr.mxu0 0.0
        %855 = vmatpush1.msra.mxu0 0.0
        %856 = vmatprep.subr.mxu0 0.0
        %857 = vmatpush1.msra.mxu0 0.0
        %858 = vmatprep.subr.mxu0 0.0
        %859 = vmatpush1.msra.mxu0 0.0
        %860 = vmatprep.mubr.f32.mxu0 0.0
        %861 = vmatmul.mubr.f32.gmra.mrb[0].mxu0 %v785
        %v862 = vpop.f32.mrb[0].mxu0
        %v863 = vadd.f32 0.0, %v862
        %v864 = vpop.f32.mrb[0].mxu0
        %865 = vmatprep.mubr.f32.mxu0 0.0
        %866 = vmatmul.mubr.f32.gmra.mrb[0].mxu0 %v788
        %v867 = vpop.f32.mrb[0].mxu0
        %v868 = vadd.f32 0.0, %v867
        %v869 = vpop.f32.mrb[0].mxu0
        %870 = vmatprep.mubr.f32.mxu0 0.0
        %871 = vmatmul.mubr.f32.gmra.mrb[0].mxu0 %v791
        %v872 = vpop.f32.mrb[0].mxu0
        %v873 = vadd.f32 0.0, %v872
        %v874 = vpop.f32.mrb[0].mxu0
        %875 = vmatprep.mubr.f32.mxu0 0.0
        %876 = vmatmul.mubr.f32.gmra.mrb[0].mxu0 %v794
        %v877 = vpop.f32.mrb[0].mxu0
        %v878 = vadd.f32 0.0, %v877
        %v879 = vpop.f32.mrb[0].mxu0
        %880 = vdwg.mxu0
        %v881 = vand.u32 2147483647, %v863
        %vm882 = vcmp.le.f32.partialorder %v881, 0.7853982
        %vm883 = vcmp.lt.s32.totalorder %v863, 0
        %v884 = vand.u32 %v863, 2139095040
        %v885 = vshrl.u32 %v884, 23
        %v886 = vsub.s32 %v885, 127
        %v887 = vand.u32 2147483647, %v863
        %v888 = vand.u32 %v887, 8388607
        %v889 = vor.u32 %v888, 8388608
        %v890 = vsub.s32 0, %v889
        %v891 = vadd.s32 %v886, 1
        %vm892 = vcmp.gt.s32.totalorder %v891, 0
        %v893 = vsel %vm892, %v891, 0
        %v894 = vshrl.u32 %v893, 5
        %v895 = vand.u32 %v893, 31
        %v896 = vsub.s32 32, %v895
        %v897 = vshrl.u32 683565275, %v896
        %v898 = vshll.u32 683565275, %v895
        %v899 = vshrl.u32 2475754826, %v896
        %v900 = vor.u32 %v898, %v899
        %v901 = vshll.u32 2475754826, %v895
        %v902 = vshrl.u32 2131351028, %v896
        %v903 = vor.u32 %v901, %v902
        %v904 = vshll.u32 2131351028, %v895
        %v905 = vshrl.u32 2102212464, %v896
        %v906 = vor.u32 %v904, %v905
        %v907 = vshll.u32 2102212464, %v895
        %v908 = vshrl.u32 920167782, %v896
        %v909 = vor.u32 %v907, %v908
        %v910 = vshll.u32 920167782, %v895
        %v911 = vshrl.u32 1326507024, %v896
        %v912 = vor.u32 %v910, %v911
        %vm913 = vcmp.lt.s32.totalorder %v894, 1
        %vm914 = vcmp.lt.s32.totalorder %v894, 2
        %vm915 = vcmp.lt.s32.totalorder %v894, 3
        %vm916 = vcmp.lt.s32.totalorder %v894, 4
        %v917 = vsel %vm913, %v897, %v900
        %v918 = vsel %vm916, %v906, 2102212464
        %v919 = vsel %vm915, %v903, %v918
        %v920 = vsel %vm914, %v917, %v919
        %v921 = vsel %vm913, %v900, %v903
        %v922 = vsel %vm916, %v909, 920167782
        %v923 = vsel %vm915, %v906, %v922
        %v924 = vsel %vm914, %v921, %v923
        %v925 = vsel %vm913, %v903, %v906
        %v926 = vsel %vm916, %v912, 1326507024
        %v927 = vsel %vm915, %v909, %v926
        %v928 = vsel %vm914, %v925, %v927
        %v929 = vshll.u32 %v889, 8
        %v930 = vmul.u32.u64.compose %v929, %v928
        %v931 = vextract.low.u32 %v930
        %v932 = vextract.high.u32 %v930
        %v933 = vmul.u32.u64.compose %v929, %v924
        %v934 = vextract.low.u32 %v933
        %v935 = vextract.high.u32 %v933
        %v936 = vmul.u32 %v929, %v920
        %v937 = vadd.s32 %v932, %v934
        %vm938 = vc.u32 %v932, %v934
        %v939 = vadd.s32 %v935, 1
        %v940 = vsel %vm938, %v939, %v935
        %v941 = vadd.s32 %v936, %v940
        %v942 = vadd.s32 %v941, 536870912
        %v943 = vshrl.u32 %v942, 30
        %v944 = vshll.u32 %v943, 30
        %v945 = vsub.s32 %v941, %v944
        %vm946 = vcmp.lt.s32.totalorder %v945, 0
        %v947 = vsub.s32 0, %v945
        %v948 = vsel %vm946, %v947, %v945
        %v949 = vclz %v948
        %v950 = vsub.s32 %v949, 2
        %vm951 = vcmp.gt.s32.totalorder 0, %v950
        %v952 = vsel %vm951, 0, %v950
        %v953 = vsub.s32 32, %v952
        %v954 = vshll.u32 %v945, %v952
        %v955 = vshrl.u32 %v937, %v953
        %v956 = vor.u32 %v954, %v955
        %v957 = vsub.s32 4294967266, %v952
        %v958 = vadd.s32 %v957, 127
        %v959 = vshll.u32 %v958, 23
        %v960 = vor.u32 4788187, %v959
        %v961 = vand.u32 2147483647, %v960
        %v963 = vcvt.s32.f32 %v956
        %v964 = vmul.f32 %v963, %v961
        %v965 = vxor.u32 %v964, 2147483648
        %v966 = vsel %vm883, %v965, %v964
        %v967 = vsub.s32 4, %v943
        %v968 = vsel %vm883, %v967, %v943
        %v969 = vsel %vm882, %v863, %v966
        %v970 = vsel %vm882, 0, %v968
        %v971 = vcosq.f32.pop %v969
        %v972 = vsinq.f32.pop %v969
        %vm973 = vweird.f32 %v863
        %v974 = vadd.s32 %v970, 3
        %v975 = vand.u32 %v974, 3
        %vm976 = vcmp.lt.s32.totalorder %v975, 2
        %vm977 = vcmp.eq.s32.totalorder %v975, 0
        %v978 = vxor.u32 %v972, 2147483648
        %v979 = vsel %vm977, %v971, %v978
        %vm980 = vcmp.eq.s32.totalorder %v975, 2
        %v981 = vxor.u32 %v971, 2147483648
        %v982 = vsel %vm980, %v981, %v972
        %v983 = vsel %vm976, %v979, %v982
        %v984 = vsel %vm973, nan, %v983
        %v985 = vand.u32 2147483647, %v868
        %vm986 = vcmp.le.f32.partialorder %v985, 0.7853982
        %vm987 = vcmp.lt.s32.totalorder %v868, 0
        %v988 = vand.u32 %v868, 2139095040
        %v989 = vshrl.u32 %v988, 23
        %v990 = vsub.s32 %v989, 127
        %v991 = vand.u32 2147483647, %v868
        %v992 = vand.u32 %v991, 8388607
        %v993 = vor.u32 %v992, 8388608
        %v994 = vsub.s32 0, %v993
        %v995 = vadd.s32 %v990, 1
        %vm996 = vcmp.gt.s32.totalorder %v995, 0
        %v997 = vsel %vm996, %v995, 0
        %v998 = vshrl.u32 %v997, 5
        %v999 = vand.u32 %v997, 31
        %v1000 = vsub.s32 32, %v999
        %v1001 = vshrl.u32 683565275, %v1000
        %v1002 = vshll.u32 683565275, %v999
        %v1003 = vshrl.u32 2475754826, %v1000
        %v1004 = vor.u32 %v1002, %v1003
        %v1005 = vshll.u32 2475754826, %v999
        %v1006 = vshrl.u32 2131351028, %v1000
        %v1007 = vor.u32 %v1005, %v1006
        %v1008 = vshll.u32 2131351028, %v999
        %v1009 = vshrl.u32 2102212464, %v1000
        %v1010 = vor.u32 %v1008, %v1009
        %v1011 = vshll.u32 2102212464, %v999
        %v1012 = vshrl.u32 920167782, %v1000
        %v1013 = vor.u32 %v1011, %v1012
        %v1014 = vshll.u32 920167782, %v999
        %v1015 = vshrl.u32 1326507024, %v1000
        %v1016 = vor.u32 %v1014, %v1015
        %vm1017 = vcmp.lt.s32.totalorder %v998, 1
        %vm1018 = vcmp.lt.s32.totalorder %v998, 2
        %vm1019 = vcmp.lt.s32.totalorder %v998, 3
        %vm1020 = vcmp.lt.s32.totalorder %v998, 4
        %v1021 = vsel %vm1017, %v1001, %v1004
        %v1022 = vsel %vm1020, %v1010, 2102212464
        %v1023 = vsel %vm1019, %v1007, %v1022
        %v1024 = vsel %vm1018, %v1021, %v1023
        %v1025 = vsel %vm1017, %v1004, %v1007
        %v1026 = vsel %vm1020, %v1013, 920167782
        %v1027 = vsel %vm1019, %v1010, %v1026
        %v1028 = vsel %vm1018, %v1025, %v1027
        %v1029 = vsel %vm1017, %v1007, %v1010
        %v1030 = vsel %vm1020, %v1016, 1326507024
        %v1031 = vsel %vm1019, %v1013, %v1030
        %v1032 = vsel %vm1018, %v1029, %v1031
        %v1033 = vshll.u32 %v993, 8
        %v1034 = vmul.u32.u64.compose %v1033, %v1032
        %v1035 = vextract.low.u32 %v1034
        %v1036 = vextract.high.u32 %v1034
        %v1037 = vmul.u32.u64.compose %v1033, %v1028
        %v1038 = vextract.low.u32 %v1037
        %v1039 = vextract.high.u32 %v1037
        %v1040 = vmul.u32 %v1033, %v1024
        %v1041 = vadd.s32 %v1036, %v1038
        %vm1042 = vc.u32 %v1036, %v1038
        %v1043 = vadd.s32 %v1039, 1
        %v1044 = vsel %vm1042, %v1043, %v1039
        %v1045 = vadd.s32 %v1040, %v1044
        %v1046 = vadd.s32 %v1045, 536870912
        %v1047 = vshrl.u32 %v1046, 30
        %v1048 = vshll.u32 %v1047, 30
        %v1049 = vsub.s32 %v1045, %v1048
        %vm1050 = vcmp.lt.s32.totalorder %v1049, 0
        %v1051 = vsub.s32 0, %v1049
        %v1052 = vsel %vm1050, %v1051, %v1049
        %v1053 = vclz %v1052
        %v1054 = vsub.s32 %v1053, 2
        %vm1055 = vcmp.gt.s32.totalorder 0, %v1054
        %v1056 = vsel %vm1055, 0, %v1054
        %v1057 = vsub.s32 32, %v1056
        %v1058 = vshll.u32 %v1049, %v1056
        %v1059 = vshrl.u32 %v1041, %v1057
        %v1060 = vor.u32 %v1058, %v1059
        %v1061 = vsub.s32 4294967266, %v1056
        %v1062 = vadd.s32 %v1061, 127
        %v1063 = vshll.u32 %v1062, 23
        %v1064 = vor.u32 4788187, %v1063
        %v1065 = vand.u32 2147483647, %v1064
        %v1067 = vcvt.s32.f32 %v1060
        %v1068 = vmul.f32 %v1067, %v1065
        %v1069 = vxor.u32 %v1068, 2147483648
        %v1070 = vsel %vm987, %v1069, %v1068
        %v1071 = vsub.s32 4, %v1047
        %v1072 = vsel %vm987, %v1071, %v1047
        %v1073 = vsel %vm986, %v868, %v1070
        %v1074 = vsel %vm986, 0, %v1072
        %v1075 = vcosq.f32.pop %v1073
        %v1076 = vsinq.f32.pop %v1073
        %vm1077 = vweird.f32 %v868
        %v1078 = vadd.s32 %v1074, 3
        %v1079 = vand.u32 %v1078, 3
        %vm1080 = vcmp.lt.s32.totalorder %v1079, 2
        %vm1081 = vcmp.eq.s32.totalorder %v1079, 0
        %v1082 = vxor.u32 %v1076, 2147483648
        %v1083 = vsel %vm1081, %v1075, %v1082
        %vm1084 = vcmp.eq.s32.totalorder %v1079, 2
        %v1085 = vxor.u32 %v1075, 2147483648
        %v1086 = vsel %vm1084, %v1085, %v1076
        %v1087 = vsel %vm1080, %v1083, %v1086
        %v1088 = vsel %vm1077, nan, %v1087
        %v1089 = vand.u32 2147483647, %v873
        %vm1090 = vcmp.le.f32.partialorder %v1089, 0.7853982
        %vm1091 = vcmp.lt.s32.totalorder %v873, 0
        %v1092 = vand.u32 %v873, 2139095040
        %v1093 = vshrl.u32 %v1092, 23
        %v1094 = vsub.s32 %v1093, 127
        %v1095 = vand.u32 2147483647, %v873
        %v1096 = vand.u32 %v1095, 8388607
        %v1097 = vor.u32 %v1096, 8388608
        %v1098 = vsub.s32 0, %v1097
        %v1099 = vadd.s32 %v1094, 1
        %vm1100 = vcmp.gt.s32.totalorder %v1099, 0
        %v1101 = vsel %vm1100, %v1099, 0
        %v1102 = vshrl.u32 %v1101, 5
        %v1103 = vand.u32 %v1101, 31
        %v1104 = vsub.s32 32, %v1103
        %v1105 = vshrl.u32 683565275, %v1104
        %v1106 = vshll.u32 683565275, %v1103
        %v1107 = vshrl.u32 2475754826, %v1104
        %v1108 = vor.u32 %v1106, %v1107
        %v1109 = vshll.u32 2475754826, %v1103
        %v1110 = vshrl.u32 2131351028, %v1104
        %v1111 = vor.u32 %v1109, %v1110
        %v1112 = vshll.u32 2131351028, %v1103
        %v1113 = vshrl.u32 2102212464, %v1104
        %v1114 = vor.u32 %v1112, %v1113
        %v1115 = vshll.u32 2102212464, %v1103
        %v1116 = vshrl.u32 920167782, %v1104
        %v1117 = vor.u32 %v1115, %v1116
        %v1118 = vshll.u32 920167782, %v1103
        %v1119 = vshrl.u32 1326507024, %v1104
        %v1120 = vor.u32 %v1118, %v1119
        %vm1121 = vcmp.lt.s32.totalorder %v1102, 1
        %vm1122 = vcmp.lt.s32.totalorder %v1102, 2
        %vm1123 = vcmp.lt.s32.totalorder %v1102, 3
        %vm1124 = vcmp.lt.s32.totalorder %v1102, 4
        %v1125 = vsel %vm1121, %v1105, %v1108
        %v1126 = vsel %vm1124, %v1114, 2102212464
        %v1127 = vsel %vm1123, %v1111, %v1126
        %v1128 = vsel %vm1122, %v1125, %v1127
        %v1129 = vsel %vm1121, %v1108, %v1111
        %v1130 = vsel %vm1124, %v1117, 920167782
        %v1131 = vsel %vm1123, %v1114, %v1130
        %v1132 = vsel %vm1122, %v1129, %v1131
        %v1133 = vsel %vm1121, %v1111, %v1114
        %v1134 = vsel %vm1124, %v1120, 1326507024
        %v1135 = vsel %vm1123, %v1117, %v1134
        %v1136 = vsel %vm1122, %v1133, %v1135
        %v1137 = vshll.u32 %v1097, 8
        %v1138 = vmul.u32.u64.compose %v1137, %v1136
        %v1139 = vextract.low.u32 %v1138
        %v1140 = vextract.high.u32 %v1138
        %v1141 = vmul.u32.u64.compose %v1137, %v1132
        %v1142 = vextract.low.u32 %v1141
        %v1143 = vextract.high.u32 %v1141
        %v1144 = vmul.u32 %v1137, %v1128
        %v1145 = vadd.s32 %v1140, %v1142
        %vm1146 = vc.u32 %v1140, %v1142
        %v1147 = vadd.s32 %v1143, 1
        %v1148 = vsel %vm1146, %v1147, %v1143
        %v1149 = vadd.s32 %v1144, %v1148
        %v1150 = vadd.s32 %v1149, 536870912
        %v1151 = vshrl.u32 %v1150, 30
        %v1152 = vshll.u32 %v1151, 30
        %v1153 = vsub.s32 %v1149, %v1152
        %vm1154 = vcmp.lt.s32.totalorder %v1153, 0
        %v1155 = vsub.s32 0, %v1153
        %v1156 = vsel %vm1154, %v1155, %v1153
        %v1157 = vclz %v1156
        %v1158 = vsub.s32 %v1157, 2
        %vm1159 = vcmp.gt.s32.totalorder 0, %v1158
        %v1160 = vsel %vm1159, 0, %v1158
        %v1161 = vsub.s32 32, %v1160
        %v1162 = vshll.u32 %v1153, %v1160
        %v1163 = vshrl.u32 %v1145, %v1161
        %v1164 = vor.u32 %v1162, %v1163
        %v1165 = vsub.s32 4294967266, %v1160
        %v1166 = vadd.s32 %v1165, 127
        %v1167 = vshll.u32 %v1166, 23
        %v1168 = vor.u32 4788187, %v1167
        %v1169 = vand.u32 2147483647, %v1168
        %v1171 = vcvt.s32.f32 %v1164
        %v1172 = vmul.f32 %v1171, %v1169
        %v1173 = vxor.u32 %v1172, 2147483648
        %v1174 = vsel %vm1091, %v1173, %v1172
        %v1175 = vsub.s32 4, %v1151
        %v1176 = vsel %vm1091, %v1175, %v1151
        %v1177 = vsel %vm1090, %v873, %v1174
        %v1178 = vsel %vm1090, 0, %v1176
        %v1179 = vcosq.f32.pop %v1177
        %v1180 = vsinq.f32.pop %v1177
        %vm1181 = vweird.f32 %v873
        %v1182 = vadd.s32 %v1178, 3
        %v1183 = vand.u32 %v1182, 3
        %vm1184 = vcmp.lt.s32.totalorder %v1183, 2
        %vm1185 = vcmp.eq.s32.totalorder %v1183, 0
        %v1186 = vxor.u32 %v1180, 2147483648
        %v1187 = vsel %vm1185, %v1179, %v1186
        %vm1188 = vcmp.eq.s32.totalorder %v1183, 2
        %v1189 = vxor.u32 %v1179, 2147483648
        %v1190 = vsel %vm1188, %v1189, %v1180
        %v1191 = vsel %vm1184, %v1187, %v1190
        %v1192 = vsel %vm1181, nan, %v1191
        %v1193 = vand.u32 2147483647, %v878
        %vm1194 = vcmp.le.f32.partialorder %v1193, 0.7853982
        %vm1195 = vcmp.lt.s32.totalorder %v878, 0
        %v1196 = vand.u32 %v878, 2139095040
        %v1197 = vshrl.u32 %v1196, 23
        %v1198 = vsub.s32 %v1197, 127
        %v1199 = vand.u32 2147483647, %v878
        %v1200 = vand.u32 %v1199, 8388607
        %v1201 = vor.u32 %v1200, 8388608
        %v1202 = vsub.s32 0, %v1201
        %v1203 = vadd.s32 %v1198, 1
        %vm1204 = vcmp.gt.s32.totalorder %v1203, 0
        %v1205 = vsel %vm1204, %v1203, 0
        %v1206 = vshrl.u32 %v1205, 5
        %v1207 = vand.u32 %v1205, 31
        %v1208 = vsub.s32 32, %v1207
        %v1209 = vshrl.u32 683565275, %v1208
        %v1210 = vshll.u32 683565275, %v1207
        %v1211 = vshrl.u32 2475754826, %v1208
        %v1212 = vor.u32 %v1210, %v1211
        %v1213 = vshll.u32 2475754826, %v1207
        %v1214 = vshrl.u32 2131351028, %v1208
        %v1215 = vor.u32 %v1213, %v1214
        %v1216 = vshll.u32 2131351028, %v1207
        %v1217 = vshrl.u32 2102212464, %v1208
        %v1218 = vor.u32 %v1216, %v1217
        %v1219 = vshll.u32 2102212464, %v1207
        %v1220 = vshrl.u32 920167782, %v1208
        %v1221 = vor.u32 %v1219, %v1220
        %v1222 = vshll.u32 920167782, %v1207
        %v1223 = vshrl.u32 1326507024, %v1208
        %v1224 = vor.u32 %v1222, %v1223
        %vm1225 = vcmp.lt.s32.totalorder %v1206, 1
        %vm1226 = vcmp.lt.s32.totalorder %v1206, 2
        %vm1227 = vcmp.lt.s32.totalorder %v1206, 3
        %vm1228 = vcmp.lt.s32.totalorder %v1206, 4
        %v1229 = vsel %vm1225, %v1209, %v1212
        %v1230 = vsel %vm1228, %v1218, 2102212464
        %v1231 = vsel %vm1227, %v1215, %v1230
        %v1232 = vsel %vm1226, %v1229, %v1231
        %v1233 = vsel %vm1225, %v1212, %v1215
        %v1234 = vsel %vm1228, %v1221, 920167782
        %v1235 = vsel %vm1227, %v1218, %v1234
        %v1236 = vsel %vm1226, %v1233, %v1235
        %v1237 = vsel %vm1225, %v1215, %v1218
        %v1238 = vsel %vm1228, %v1224, 1326507024
        %v1239 = vsel %vm1227, %v1221, %v1238
        %v1240 = vsel %vm1226, %v1237, %v1239
        %v1241 = vshll.u32 %v1201, 8
        %v1242 = vmul.u32.u64.compose %v1241, %v1240
        %v1243 = vextract.low.u32 %v1242
        %v1244 = vextract.high.u32 %v1242
        %v1245 = vmul.u32.u64.compose %v1241, %v1236
        %v1246 = vextract.low.u32 %v1245
        %v1247 = vextract.high.u32 %v1245
        %v1248 = vmul.u32 %v1241, %v1232
        %v1249 = vadd.s32 %v1244, %v1246
        %vm1250 = vc.u32 %v1244, %v1246
        %v1251 = vadd.s32 %v1247, 1
        %v1252 = vsel %vm1250, %v1251, %v1247
        %v1253 = vadd.s32 %v1248, %v1252
        %v1254 = vadd.s32 %v1253, 536870912
        %v1255 = vshrl.u32 %v1254, 30
        %v1256 = vshll.u32 %v1255, 30
        %v1257 = vsub.s32 %v1253, %v1256
        %vm1258 = vcmp.lt.s32.totalorder %v1257, 0
        %v1259 = vsub.s32 0, %v1257
        %v1260 = vsel %vm1258, %v1259, %v1257
        %v1261 = vclz %v1260
        %v1262 = vsub.s32 %v1261, 2
        %vm1263 = vcmp.gt.s32.totalorder 0, %v1262
        %v1264 = vsel %vm1263, 0, %v1262
        %v1265 = vsub.s32 32, %v1264
        %v1266 = vshll.u32 %v1257, %v1264
        %v1267 = vshrl.u32 %v1249, %v1265
        %v1268 = vor.u32 %v1266, %v1267
        %v1269 = vsub.s32 4294967266, %v1264
        %v1270 = vadd.s32 %v1269, 127
        %v1271 = vshll.u32 %v1270, 23
        %v1272 = vor.u32 4788187, %v1271
        %v1273 = vand.u32 2147483647, %v1272
        %v1275 = vcvt.s32.f32 %v1268
        %v1276 = vmul.f32 %v1275, %v1273
        %v1277 = vxor.u32 %v1276, 2147483648
        %v1278 = vsel %vm1195, %v1277, %v1276
        %v1279 = vsub.s32 4, %v1255
        %v1280 = vsel %vm1195, %v1279, %v1255
        %v1281 = vsel %vm1194, %v878, %v1278
        %v1282 = vsel %vm1194, 0, %v1280
        %v1283 = vcosq.f32.pop %v1281
        %v1284 = vsinq.f32.pop %v1281
        %vm1285 = vweird.f32 %v878
        %v1286 = vadd.s32 %v1282, 3
        %v1287 = vand.u32 %v1286, 3
        %vm1288 = vcmp.lt.s32.totalorder %v1287, 2
        %vm1289 = vcmp.eq.s32.totalorder %v1287, 0
        %v1290 = vxor.u32 %v1284, 2147483648
        %v1291 = vsel %vm1289, %v1283, %v1290
        %vm1292 = vcmp.eq.s32.totalorder %v1287, 2
        %v1293 = vxor.u32 %v1283, 2147483648
        %v1294 = vsel %vm1292, %v1293, %v1284
        %v1295 = vsel %vm1288, %v1291, %v1294
        %v1296 = vsel %vm1285, nan, %v1295
        %v1297 = vand.u32 2147483647, %v863
        %vm1298 = vcmp.le.f32.partialorder %v1297, 0.7853982
        %vm1299 = vcmp.lt.s32.totalorder %v863, 0
        %v1300 = vand.u32 %v863, 2139095040
        %v1301 = vshrl.u32 %v1300, 23
        %v1302 = vsub.s32 %v1301, 127
        %v1303 = vand.u32 2147483647, %v863
        %v1304 = vand.u32 %v1303, 8388607
        %v1305 = vor.u32 %v1304, 8388608
        %v1306 = vsub.s32 0, %v1305
        %v1307 = vadd.s32 %v1302, 1
        %vm1308 = vcmp.gt.s32.totalorder %v1307, 0
        %v1309 = vsel %vm1308, %v1307, 0
        %v1310 = vshrl.u32 %v1309, 5
        %v1311 = vand.u32 %v1309, 31
        %v1312 = vsub.s32 32, %v1311
        %v1313 = vshrl.u32 683565275, %v1312
        %v1314 = vshll.u32 683565275, %v1311
        %v1315 = vshrl.u32 2475754826, %v1312
        %v1316 = vor.u32 %v1314, %v1315
        %v1317 = vshll.u32 2475754826, %v1311
        %v1318 = vshrl.u32 2131351028, %v1312
        %v1319 = vor.u32 %v1317, %v1318
        %v1320 = vshll.u32 2131351028, %v1311
        %v1321 = vshrl.u32 2102212464, %v1312
        %v1322 = vor.u32 %v1320, %v1321
        %v1323 = vshll.u32 2102212464, %v1311
        %v1324 = vshrl.u32 920167782, %v1312
        %v1325 = vor.u32 %v1323, %v1324
        %v1326 = vshll.u32 920167782, %v1311
        %v1327 = vshrl.u32 1326507024, %v1312
        %v1328 = vor.u32 %v1326, %v1327
        %vm1329 = vcmp.lt.s32.totalorder %v1310, 1
        %vm1330 = vcmp.lt.s32.totalorder %v1310, 2
        %vm1331 = vcmp.lt.s32.totalorder %v1310, 3
        %vm1332 = vcmp.lt.s32.totalorder %v1310, 4
        %v1333 = vsel %vm1329, %v1313, %v1316
        %v1334 = vsel %vm1332, %v1322, 2102212464
        %v1335 = vsel %vm1331, %v1319, %v1334
        %v1336 = vsel %vm1330, %v1333, %v1335
        %v1337 = vsel %vm1329, %v1316, %v1319
        %v1338 = vsel %vm1332, %v1325, 920167782
        %v1339 = vsel %vm1331, %v1322, %v1338
        %v1340 = vsel %vm1330, %v1337, %v1339
        %v1341 = vsel %vm1329, %v1319, %v1322
        %v1342 = vsel %vm1332, %v1328, 1326507024
        %v1343 = vsel %vm1331, %v1325, %v1342
        %v1344 = vsel %vm1330, %v1341, %v1343
        %v1345 = vshll.u32 %v1305, 8
        %v1346 = vmul.u32.u64.compose %v1345, %v1344
        %v1347 = vextract.low.u32 %v1346
        %v1348 = vextract.high.u32 %v1346
        %v1349 = vmul.u32.u64.compose %v1345, %v1340
        %v1350 = vextract.low.u32 %v1349
        %v1351 = vextract.high.u32 %v1349
        %v1352 = vmul.u32 %v1345, %v1336
        %v1353 = vadd.s32 %v1348, %v1350
        %vm1354 = vc.u32 %v1348, %v1350
        %v1355 = vadd.s32 %v1351, 1
        %v1356 = vsel %vm1354, %v1355, %v1351
        %v1357 = vadd.s32 %v1352, %v1356
        %v1358 = vadd.s32 %v1357, 536870912
        %v1359 = vshrl.u32 %v1358, 30
        %v1360 = vshll.u32 %v1359, 30
        %v1361 = vsub.s32 %v1357, %v1360
        %vm1362 = vcmp.lt.s32.totalorder %v1361, 0
        %v1363 = vsub.s32 0, %v1361
        %v1364 = vsel %vm1362, %v1363, %v1361
        %v1365 = vclz %v1364
        %v1366 = vsub.s32 %v1365, 2
        %vm1367 = vcmp.gt.s32.totalorder 0, %v1366
        %v1368 = vsel %vm1367, 0, %v1366
        %v1369 = vsub.s32 32, %v1368
        %v1370 = vshll.u32 %v1361, %v1368
        %v1371 = vshrl.u32 %v1353, %v1369
        %v1372 = vor.u32 %v1370, %v1371
        %v1373 = vsub.s32 4294967266, %v1368
        %v1374 = vadd.s32 %v1373, 127
        %v1375 = vshll.u32 %v1374, 23
        %v1376 = vor.u32 4788187, %v1375
        %v1377 = vand.u32 2147483647, %v1376
        %v1379 = vcvt.s32.f32 %v1372
        %v1380 = vmul.f32 %v1379, %v1377
        %v1381 = vxor.u32 %v1380, 2147483648
        %v1382 = vsel %vm1299, %v1381, %v1380
        %v1383 = vsub.s32 4, %v1359
        %v1384 = vsel %vm1299, %v1383, %v1359
        %v1385 = vsel %vm1298, %v863, %v1382
        %v1386 = vsel %vm1298, 0, %v1384
        %v1387 = vcosq.f32.pop %v1385
        %v1388 = vsinq.f32.pop %v1385
        %vm1389 = vweird.f32 %v863
        %v1390 = vand.u32 %v1386, 3
        %vm1391 = vcmp.lt.s32.totalorder %v1390, 2
        %vm1392 = vcmp.eq.s32.totalorder %v1390, 0
        %v1393 = vxor.u32 %v1388, 2147483648
        %v1394 = vsel %vm1392, %v1387, %v1393
        %vm1395 = vcmp.eq.s32.totalorder %v1390, 2
        %v1396 = vxor.u32 %v1387, 2147483648
        %v1397 = vsel %vm1395, %v1396, %v1388
        %v1398 = vsel %vm1391, %v1394, %v1397
        %v1399 = vsel %vm1389, nan, %v1398
        %v1400 = vand.u32 2147483647, %v868
        %vm1401 = vcmp.le.f32.partialorder %v1400, 0.7853982
        %vm1402 = vcmp.lt.s32.totalorder %v868, 0
        %v1403 = vand.u32 %v868, 2139095040
        %v1404 = vshrl.u32 %v1403, 23
        %v1405 = vsub.s32 %v1404, 127
        %v1406 = vand.u32 2147483647, %v868
        %v1407 = vand.u32 %v1406, 8388607
        %v1408 = vor.u32 %v1407, 8388608
        %v1409 = vsub.s32 0, %v1408
        %v1410 = vadd.s32 %v1405, 1
        %vm1411 = vcmp.gt.s32.totalorder %v1410, 0
        %v1412 = vsel %vm1411, %v1410, 0
        %v1413 = vshrl.u32 %v1412, 5
        %v1414 = vand.u32 %v1412, 31
        %v1415 = vsub.s32 32, %v1414
        %v1416 = vshrl.u32 683565275, %v1415
        %v1417 = vshll.u32 683565275, %v1414
        %v1418 = vshrl.u32 2475754826, %v1415
        %v1419 = vor.u32 %v1417, %v1418
        %v1420 = vshll.u32 2475754826, %v1414
        %v1421 = vshrl.u32 2131351028, %v1415
        %v1422 = vor.u32 %v1420, %v1421
        %v1423 = vshll.u32 2131351028, %v1414
        %v1424 = vshrl.u32 2102212464, %v1415
        %v1425 = vor.u32 %v1423, %v1424
        %v1426 = vshll.u32 2102212464, %v1414
        %v1427 = vshrl.u32 920167782, %v1415
        %v1428 = vor.u32 %v1426, %v1427
        %v1429 = vshll.u32 920167782, %v1414
        %v1430 = vshrl.u32 1326507024, %v1415
        %v1431 = vor.u32 %v1429, %v1430
        %vm1432 = vcmp.lt.s32.totalorder %v1413, 1
        %vm1433 = vcmp.lt.s32.totalorder %v1413, 2
        %vm1434 = vcmp.lt.s32.totalorder %v1413, 3
        %vm1435 = vcmp.lt.s32.totalorder %v1413, 4
        %v1436 = vsel %vm1432, %v1416, %v1419
        %v1437 = vsel %vm1435, %v1425, 2102212464
        %v1438 = vsel %vm1434, %v1422, %v1437
        %v1439 = vsel %vm1433, %v1436, %v1438
        %v1440 = vsel %vm1432, %v1419, %v1422
        %v1441 = vsel %vm1435, %v1428, 920167782
        %v1442 = vsel %vm1434, %v1425, %v1441
        %v1443 = vsel %vm1433, %v1440, %v1442
        %v1444 = vsel %vm1432, %v1422, %v1425
        %v1445 = vsel %vm1435, %v1431, 1326507024
        %v1446 = vsel %vm1434, %v1428, %v1445
        %v1447 = vsel %vm1433, %v1444, %v1446
        %v1448 = vshll.u32 %v1408, 8
        %v1449 = vmul.u32.u64.compose %v1448, %v1447
        %v1450 = vextract.low.u32 %v1449
        %v1451 = vextract.high.u32 %v1449
        %v1452 = vmul.u32.u64.compose %v1448, %v1443
        %v1453 = vextract.low.u32 %v1452
        %v1454 = vextract.high.u32 %v1452
        %v1455 = vmul.u32 %v1448, %v1439
        %v1456 = vadd.s32 %v1451, %v1453
        %vm1457 = vc.u32 %v1451, %v1453
        %v1458 = vadd.s32 %v1454, 1
        %v1459 = vsel %vm1457, %v1458, %v1454
        %v1460 = vadd.s32 %v1455, %v1459
        %v1461 = vadd.s32 %v1460, 536870912
        %v1462 = vshrl.u32 %v1461, 30
        %v1463 = vshll.u32 %v1462, 30
        %v1464 = vsub.s32 %v1460, %v1463
        %vm1465 = vcmp.lt.s32.totalorder %v1464, 0
        %v1466 = vsub.s32 0, %v1464
        %v1467 = vsel %vm1465, %v1466, %v1464
        %v1468 = vclz %v1467
        %v1469 = vsub.s32 %v1468, 2
        %vm1470 = vcmp.gt.s32.totalorder 0, %v1469
        %v1471 = vsel %vm1470, 0, %v1469
        %v1472 = vsub.s32 32, %v1471
        %v1473 = vshll.u32 %v1464, %v1471
        %v1474 = vshrl.u32 %v1456, %v1472
        %v1475 = vor.u32 %v1473, %v1474
        %v1476 = vsub.s32 4294967266, %v1471
        %v1477 = vadd.s32 %v1476, 127
        %v1478 = vshll.u32 %v1477, 23
        %v1479 = vor.u32 4788187, %v1478
        %v1480 = vand.u32 2147483647, %v1479
        %v1482 = vcvt.s32.f32 %v1475
        %v1483 = vmul.f32 %v1482, %v1480
        %v1484 = vxor.u32 %v1483, 2147483648
        %v1485 = vsel %vm1402, %v1484, %v1483
        %v1486 = vsub.s32 4, %v1462
        %v1487 = vsel %vm1402, %v1486, %v1462
        %v1488 = vsel %vm1401, %v868, %v1485
        %v1489 = vsel %vm1401, 0, %v1487
        %v1490 = vcosq.f32.pop %v1488
        %v1491 = vsinq.f32.pop %v1488
        %vm1492 = vweird.f32 %v868
        %v1493 = vand.u32 %v1489, 3
        %vm1494 = vcmp.lt.s32.totalorder %v1493, 2
        %vm1495 = vcmp.eq.s32.totalorder %v1493, 0
        %v1496 = vxor.u32 %v1491, 2147483648
        %v1497 = vsel %vm1495, %v1490, %v1496
        %vm1498 = vcmp.eq.s32.totalorder %v1493, 2
        %v1499 = vxor.u32 %v1490, 2147483648
        %v1500 = vsel %vm1498, %v1499, %v1491
        %v1501 = vsel %vm1494, %v1497, %v1500
        %v1502 = vsel %vm1492, nan, %v1501
        %v1503 = vand.u32 2147483647, %v873
        %vm1504 = vcmp.le.f32.partialorder %v1503, 0.7853982
        %vm1505 = vcmp.lt.s32.totalorder %v873, 0
        %v1506 = vand.u32 %v873, 2139095040
        %v1507 = vshrl.u32 %v1506, 23
        %v1508 = vsub.s32 %v1507, 127
        %v1509 = vand.u32 2147483647, %v873
        %v1510 = vand.u32 %v1509, 8388607
        %v1511 = vor.u32 %v1510, 8388608
        %v1512 = vsub.s32 0, %v1511
        %v1513 = vadd.s32 %v1508, 1
        %vm1514 = vcmp.gt.s32.totalorder %v1513, 0
        %v1515 = vsel %vm1514, %v1513, 0
        %v1516 = vshrl.u32 %v1515, 5
        %v1517 = vand.u32 %v1515, 31
        %v1518 = vsub.s32 32, %v1517
        %v1519 = vshrl.u32 683565275, %v1518
        %v1520 = vshll.u32 683565275, %v1517
        %v1521 = vshrl.u32 2475754826, %v1518
        %v1522 = vor.u32 %v1520, %v1521
        %v1523 = vshll.u32 2475754826, %v1517
        %v1524 = vshrl.u32 2131351028, %v1518
        %v1525 = vor.u32 %v1523, %v1524
        %v1526 = vshll.u32 2131351028, %v1517
        %v1527 = vshrl.u32 2102212464, %v1518
        %v1528 = vor.u32 %v1526, %v1527
        %v1529 = vshll.u32 2102212464, %v1517
        %v1530 = vshrl.u32 920167782, %v1518
        %v1531 = vor.u32 %v1529, %v1530
        %v1532 = vshll.u32 920167782, %v1517
        %v1533 = vshrl.u32 1326507024, %v1518
        %v1534 = vor.u32 %v1532, %v1533
        %vm1535 = vcmp.lt.s32.totalorder %v1516, 1
        %vm1536 = vcmp.lt.s32.totalorder %v1516, 2
        %vm1537 = vcmp.lt.s32.totalorder %v1516, 3
        %vm1538 = vcmp.lt.s32.totalorder %v1516, 4
        %v1539 = vsel %vm1535, %v1519, %v1522
        %v1540 = vsel %vm1538, %v1528, 2102212464
        %v1541 = vsel %vm1537, %v1525, %v1540
        %v1542 = vsel %vm1536, %v1539, %v1541
        %v1543 = vsel %vm1535, %v1522, %v1525
        %v1544 = vsel %vm1538, %v1531, 920167782
        %v1545 = vsel %vm1537, %v1528, %v1544
        %v1546 = vsel %vm1536, %v1543, %v1545
        %v1547 = vsel %vm1535, %v1525, %v1528
        %v1548 = vsel %vm1538, %v1534, 1326507024
        %v1549 = vsel %vm1537, %v1531, %v1548
        %v1550 = vsel %vm1536, %v1547, %v1549
        %v1551 = vshll.u32 %v1511, 8
        %v1552 = vmul.u32.u64.compose %v1551, %v1550
        %v1553 = vextract.low.u32 %v1552
        %v1554 = vextract.high.u32 %v1552
        %v1555 = vmul.u32.u64.compose %v1551, %v1546
        %v1556 = vextract.low.u32 %v1555
        %v1557 = vextract.high.u32 %v1555
        %v1558 = vmul.u32 %v1551, %v1542
        %v1559 = vadd.s32 %v1554, %v1556
        %vm1560 = vc.u32 %v1554, %v1556
        %v1561 = vadd.s32 %v1557, 1
        %v1562 = vsel %vm1560, %v1561, %v1557
        %v1563 = vadd.s32 %v1558, %v1562
        %v1564 = vadd.s32 %v1563, 536870912
        %v1565 = vshrl.u32 %v1564, 30
        %v1566 = vshll.u32 %v1565, 30
        %v1567 = vsub.s32 %v1563, %v1566
        %vm1568 = vcmp.lt.s32.totalorder %v1567, 0
        %v1569 = vsub.s32 0, %v1567
        %v1570 = vsel %vm1568, %v1569, %v1567
        %v1571 = vclz %v1570
        %v1572 = vsub.s32 %v1571, 2
        %vm1573 = vcmp.gt.s32.totalorder 0, %v1572
        %v1574 = vsel %vm1573, 0, %v1572
        %v1575 = vsub.s32 32, %v1574
        %v1576 = vshll.u32 %v1567, %v1574
        %v1577 = vshrl.u32 %v1559, %v1575
        %v1578 = vor.u32 %v1576, %v1577
        %v1579 = vsub.s32 4294967266, %v1574
        %v1580 = vadd.s32 %v1579, 127
        %v1581 = vshll.u32 %v1580, 23
        %v1582 = vor.u32 4788187, %v1581
        %v1583 = vand.u32 2147483647, %v1582
        %v1585 = vcvt.s32.f32 %v1578
        %v1586 = vmul.f32 %v1585, %v1583
        %v1587 = vxor.u32 %v1586, 2147483648
        %v1588 = vsel %vm1505, %v1587, %v1586
        %v1589 = vsub.s32 4, %v1565
        %v1590 = vsel %vm1505, %v1589, %v1565
        %v1591 = vsel %vm1504, %v873, %v1588
        %v1592 = vsel %vm1504, 0, %v1590
        %v1593 = vcosq.f32.pop %v1591
        %v1594 = vsinq.f32.pop %v1591
        %vm1595 = vweird.f32 %v873
        %v1596 = vand.u32 %v1592, 3
        %vm1597 = vcmp.lt.s32.totalorder %v1596, 2
        %vm1598 = vcmp.eq.s32.totalorder %v1596, 0
        %v1599 = vxor.u32 %v1594, 2147483648
        %v1600 = vsel %vm1598, %v1593, %v1599
        %vm1601 = vcmp.eq.s32.totalorder %v1596, 2
        %v1602 = vxor.u32 %v1593, 2147483648
        %v1603 = vsel %vm1601, %v1602, %v1594
        %v1604 = vsel %vm1597, %v1600, %v1603
        %v1605 = vsel %vm1595, nan, %v1604
        %v1606 = vand.u32 2147483647, %v878
        %vm1607 = vcmp.le.f32.partialorder %v1606, 0.7853982
        %vm1608 = vcmp.lt.s32.totalorder %v878, 0
        %v1609 = vand.u32 %v878, 2139095040
        %v1610 = vshrl.u32 %v1609, 23
        %v1611 = vsub.s32 %v1610, 127
        %v1612 = vand.u32 2147483647, %v878
        %v1613 = vand.u32 %v1612, 8388607
        %v1614 = vor.u32 %v1613, 8388608
        %v1615 = vsub.s32 0, %v1614
        %v1616 = vadd.s32 %v1611, 1
        %vm1617 = vcmp.gt.s32.totalorder %v1616, 0
        %v1618 = vsel %vm1617, %v1616, 0
        %v1619 = vshrl.u32 %v1618, 5
        %v1620 = vand.u32 %v1618, 31
        %v1621 = vsub.s32 32, %v1620
        %v1622 = vshrl.u32 683565275, %v1621
        %v1623 = vshll.u32 683565275, %v1620
        %v1624 = vshrl.u32 2475754826, %v1621
        %v1625 = vor.u32 %v1623, %v1624
        %v1626 = vshll.u32 2475754826, %v1620
        %v1627 = vshrl.u32 2131351028, %v1621
        %v1628 = vor.u32 %v1626, %v1627
        %v1629 = vshll.u32 2131351028, %v1620
        %v1630 = vshrl.u32 2102212464, %v1621
        %v1631 = vor.u32 %v1629, %v1630
        %v1632 = vshll.u32 2102212464, %v1620
        %v1633 = vshrl.u32 920167782, %v1621
        %v1634 = vor.u32 %v1632, %v1633
        %v1635 = vshll.u32 920167782, %v1620
        %v1636 = vshrl.u32 1326507024, %v1621
        %v1637 = vor.u32 %v1635, %v1636
        %vm1638 = vcmp.lt.s32.totalorder %v1619, 1
        %vm1639 = vcmp.lt.s32.totalorder %v1619, 2
        %vm1640 = vcmp.lt.s32.totalorder %v1619, 3
        %vm1641 = vcmp.lt.s32.totalorder %v1619, 4
        %v1642 = vsel %vm1638, %v1622, %v1625
        %v1643 = vsel %vm1641, %v1631, 2102212464
        %v1644 = vsel %vm1640, %v1628, %v1643
        %v1645 = vsel %vm1639, %v1642, %v1644
        %v1646 = vsel %vm1638, %v1625, %v1628
        %v1647 = vsel %vm1641, %v1634, 920167782
        %v1648 = vsel %vm1640, %v1631, %v1647
        %v1649 = vsel %vm1639, %v1646, %v1648
        %v1650 = vsel %vm1638, %v1628, %v1631
        %v1651 = vsel %vm1641, %v1637, 1326507024
        %v1652 = vsel %vm1640, %v1634, %v1651
        %v1653 = vsel %vm1639, %v1650, %v1652
        %v1654 = vshll.u32 %v1614, 8
        %v1655 = vmul.u32.u64.compose %v1654, %v1653
        %v1656 = vextract.low.u32 %v1655
        %v1657 = vextract.high.u32 %v1655
        %v1658 = vmul.u32.u64.compose %v1654, %v1649
        %v1659 = vextract.low.u32 %v1658
        %v1660 = vextract.high.u32 %v1658
        %v1661 = vmul.u32 %v1654, %v1645
        %v1662 = vadd.s32 %v1657, %v1659
        %vm1663 = vc.u32 %v1657, %v1659
        %v1664 = vadd.s32 %v1660, 1
        %v1665 = vsel %vm1663, %v1664, %v1660
        %v1666 = vadd.s32 %v1661, %v1665
        %v1667 = vadd.s32 %v1666, 536870912
        %v1668 = vshrl.u32 %v1667, 30
        %v1669 = vshll.u32 %v1668, 30
        %v1670 = vsub.s32 %v1666, %v1669
        %vm1671 = vcmp.lt.s32.totalorder %v1670, 0
        %v1672 = vsub.s32 0, %v1670
        %v1673 = vsel %vm1671, %v1672, %v1670
        %v1674 = vclz %v1673
        %v1675 = vsub.s32 %v1674, 2
        %vm1676 = vcmp.gt.s32.totalorder 0, %v1675
        %v1677 = vsel %vm1676, 0, %v1675
        %v1678 = vsub.s32 32, %v1677
        %v1679 = vshll.u32 %v1670, %v1677
        %v1680 = vshrl.u32 %v1662, %v1678
        %v1681 = vor.u32 %v1679, %v1680
        %v1682 = vsub.s32 4294967266, %v1677
        %v1683 = vadd.s32 %v1682, 127
        %v1684 = vshll.u32 %v1683, 23
        %v1685 = vor.u32 4788187, %v1684
        %v1686 = vand.u32 2147483647, %v1685
        %v1688 = vcvt.s32.f32 %v1681
        %v1689 = vmul.f32 %v1688, %v1686
        %v1690 = vxor.u32 %v1689, 2147483648
        %v1691 = vsel %vm1608, %v1690, %v1689
        %v1692 = vsub.s32 4, %v1668
        %v1693 = vsel %vm1608, %v1692, %v1668
        %v1694 = vsel %vm1607, %v878, %v1691
        %v1695 = vsel %vm1607, 0, %v1693
        %v1696 = vcosq.f32.pop %v1694
        %v1697 = vsinq.f32.pop %v1694
        %vm1698 = vweird.f32 %v878
        %v1699 = vand.u32 %v1695, 3
        %vm1700 = vcmp.lt.s32.totalorder %v1699, 2
        %vm1701 = vcmp.eq.s32.totalorder %v1699, 0
        %v1702 = vxor.u32 %v1697, 2147483648
        %v1703 = vsel %vm1701, %v1696, %v1702
        %vm1704 = vcmp.eq.s32.totalorder %v1699, 2
        %v1705 = vxor.u32 %v1696, 2147483648
        %v1706 = vsel %vm1704, %v1705, %v1697
        %v1707 = vsel %vm1700, %v1703, %v1706
        %v1708 = vsel %vm1698, nan, %v1707
        %v1709 = vadd.f32 %v293, 0.5
        %v1710 = vmul.f32 %v1709, 0.125
        %v1711 = vfloor.f32 %v1710
        %v1712 = vmul.f32 %v1711, 8.0
        %v1713 = vsub.f32 %v293, %v1712
        %v1714 = vcvt.f32.s32.to.zero.pseudo %v1713
        %v1715 = vand.u32 %v1714, 1
        %vm1716 = vcmp.eq.s32.totalorder %v1715, 1
        %v1717 = vsel %vm1716, %v984, 1.0
        %v1718 = vsel %vm1716, %v1088, 1.0
        %v1719 = vsel %vm1716, %v1192, 1.0
        %v1720 = vsel %vm1716, %v1296, 1.0
        %v1721 = vmul.f32 %v984, %v984
        %v1722 = vmul.f32 %v1088, %v1088
        %v1723 = vmul.f32 %v1192, %v1192
        %v1724 = vmul.f32 %v1296, %v1296
        %v1725 = vshra.s32 %v1714, 1
        %v1726 = vand.u32 %v1725, 1
        %vm1727 = vcmp.eq.s32.totalorder %v1726, 1
        %v1728 = vmul.f32 %v1717, %v1721
        %v1729 = vmul.f32 %v1718, %v1722
        %v1730 = vmul.f32 %v1719, %v1723
        %v1731 = vmul.f32 %v1720, %v1724
        %v1732 = vsel %vm1727, %v1728, %v1717
        %v1733 = vsel %vm1727, %v1729, %v1718
        %v1734 = vsel %vm1727, %v1730, %v1719
        %v1735 = vsel %vm1727, %v1731, %v1720
        %v1736 = vmul.f32 %v1721, %v1721
        %v1737 = vmul.f32 %v1722, %v1722
        %v1738 = vmul.f32 %v1723, %v1723
        %v1739 = vmul.f32 %v1724, %v1724
        %v1740 = vshra.s32 %v1714, 2
        %v1741 = vand.u32 %v1740, 1
        %vm1742 = vcmp.eq.s32.totalorder %v1741, 1
        %v1743 = vmul.f32 %v1732, %v1736
        %v1744 = vmul.f32 %v1733, %v1737
        %v1745 = vmul.f32 %v1734, %v1738
        %v1746 = vmul.f32 %v1735, %v1739
        %v1747 = vsel %vm1742, %v1743, %v1732
        %v1748 = vsel %vm1742, %v1744, %v1733
        %v1749 = vsel %vm1742, %v1745, %v1734
        %v1750 = vsel %vm1742, %v1746, %v1735
        %vm1751 = vcmp.lt.s32.totalorder %v1714, 7
        %v1752 = vsel %vm1751, %v1399, 1.0
        %v1753 = vsel %vm1751, %v1502, 1.0
        %v1754 = vsel %vm1751, %v1605, 1.0
        %v1755 = vsel %vm1751, %v1708, 1.0
        %v1756 = vmul.f32 %v1747, %v1752
        %v1757 = vmul.f32 %v1748, %v1753
        %v1758 = vmul.f32 %v1749, %v1754
        %v1759 = vmul.f32 %v1750, %v1755
        %v1760 = vld [vmem:[%s241] sm:$0xff]
        %v1761 = vld [vmem:[%s241 + $0x8] sm:$0xff]
        %v1762 = vld [vmem:[%s241 + $0x10] sm:$0xff]
        %v1763 = vld [vmem:[%s241 + $0x18] sm:$0xff]
        %v1764 = vld [vmem:[%s241 + $0x20] sm:$0xff]
        %v1765 = vld [vmem:[%s241 + $0x28] sm:$0xff]
        %v1766 = vld [vmem:[%s241 + $0x30] sm:$0xff]
        %v1767 = vld [vmem:[%s241 + $0x38] sm:$0xff]
        %v1768 = vld [vmem:[%s241 + $0x40] sm:$0xff]
        %v1769 = vld [vmem:[%s241 + $0x48] sm:$0xff]
        %v1770 = vld [vmem:[%s241 + $0x50] sm:$0xff]
        %v1771 = vld [vmem:[%s241 + $0x58] sm:$0xff]
        %v1772 = vld [vmem:[%s241 + $0x60] sm:$0xff]
        %v1773 = vld [vmem:[%s241 + $0x68] sm:$0xff]
        %v1774 = vld [vmem:[%s241 + $0x70] sm:$0xff]
        %v1775 = vld [vmem:[%s241 + $0x78] sm:$0xff]
        %1776 = vmatprep.subr.mxu0 0.0
        %1777 = vmatpush1.msra.mxu0 %v1760
        %1778 = vmatprep.subr.mxu0 0.0
        %1779 = vmatpush1.msra.mxu0 %v1761
        %1780 = vmatprep.subr.mxu0 0.0
        %1781 = vmatpush1.msra.mxu0 %v1762
        %1782 = vmatprep.subr.mxu0 0.0
        %1783 = vmatpush1.msra.mxu0 %v1763
        %1784 = vmatprep.subr.mxu0 0.0
        %1785 = vmatpush1.msra.mxu0 %v1764
        %1786 = vmatprep.subr.mxu0 0.0
        %1787 = vmatpush1.msra.mxu0 %v1765
        %1788 = vmatprep.subr.mxu0 0.0
        %1789 = vmatpush1.msra.mxu0 %v1766
        %1790 = vmatprep.subr.mxu0 0.0
        %1791 = vmatpush1.msra.mxu0 %v1767
        %1792 = vmatprep.subr.mxu0 0.0
        %1793 = vmatpush1.msra.mxu0 %v1768
        %1794 = vmatprep.subr.mxu0 0.0
        %1795 = vmatpush1.msra.mxu0 %v1769
        %1796 = vmatprep.subr.mxu0 0.0
        %1797 = vmatpush1.msra.mxu0 %v1770
        %1798 = vmatprep.subr.mxu0 0.0
        %1799 = vmatpush1.msra.mxu0 %v1771
        %1800 = vmatprep.subr.mxu0 0.0
        %1801 = vmatpush1.msra.mxu0 %v1772
        %1802 = vmatprep.subr.mxu0 0.0
        %1803 = vmatpush1.msra.mxu0 %v1773
        %1804 = vmatprep.subr.mxu0 0.0
        %1805 = vmatpush1.msra.mxu0 %v1774
        %1806 = vmatprep.subr.mxu0 0.0
        %1807 = vmatpush1.msra.mxu0 %v1775
        %1808 = vmatprep.subr.mxu0 0.0
        %1809 = vmatpush1.msra.mxu0 0.0
        %1810 = vmatprep.subr.mxu0 0.0
        %1811 = vmatpush1.msra.mxu0 0.0
        %1812 = vmatprep.subr.mxu0 0.0
        %1813 = vmatpush1.msra.mxu0 0.0
        %1814 = vmatprep.subr.mxu0 0.0
        %1815 = vmatpush1.msra.mxu0 0.0
        %1816 = vmatprep.subr.mxu0 0.0
        %1817 = vmatpush1.msra.mxu0 0.0
        %1818 = vmatprep.subr.mxu0 0.0
        %1819 = vmatpush1.msra.mxu0 0.0
        %1820 = vmatprep.subr.mxu0 0.0
        %1821 = vmatpush1.msra.mxu0 0.0
        %1822 = vmatprep.subr.mxu0 0.0
        %1823 = vmatpush1.msra.mxu0 0.0
        %1824 = vmatprep.subr.mxu0 0.0
        %1825 = vmatpush1.msra.mxu0 0.0
        %1826 = vmatprep.subr.mxu0 0.0
        %1827 = vmatpush1.msra.mxu0 0.0
        %1828 = vmatprep.subr.mxu0 0.0
        %1829 = vmatpush1.msra.mxu0 0.0
        %1830 = vmatprep.subr.mxu0 0.0
        %1831 = vmatpush1.msra.mxu0 0.0
        %1832 = vmatprep.subr.mxu0 0.0
        %1833 = vmatpush1.msra.mxu0 0.0
        %1834 = vmatprep.subr.mxu0 0.0
        %1835 = vmatpush1.msra.mxu0 0.0
        %1836 = vmatprep.subr.mxu0 0.0
        %1837 = vmatpush1.msra.mxu0 0.0
        %1838 = vmatprep.subr.mxu0 0.0
        %1839 = vmatpush1.msra.mxu0 0.0
        %1840 = vmatprep.mubr.f32.mxu0 0.0
        %1841 = vmatmul.mubr.f32.gmra.mrb[0].mxu0 %v1756
        %v1842 = vpop.f32.mrb[0].mxu0
        %v1843 = vadd.f32 0.0, %v1842
        %v1844 = vpop.f32.mrb[0].mxu0
        %1845 = vmatprep.mubr.f32.mxu0 0.0
        %1846 = vmatmul.mubr.f32.gmra.mrb[0].mxu0 %v1757
        %v1847 = vpop.f32.mrb[0].mxu0
        %v1848 = vadd.f32 0.0, %v1847
        %v1849 = vpop.f32.mrb[0].mxu0
        %1850 = vmatprep.mubr.f32.mxu0 0.0
        %1851 = vmatmul.mubr.f32.gmra.mrb[0].mxu0 %v1758
        %v1852 = vpop.f32.mrb[0].mxu0
        %v1853 = vadd.f32 0.0, %v1852
        %v1854 = vpop.f32.mrb[0].mxu0
        %1855 = vmatprep.mubr.f32.mxu0 0.0
        %1856 = vmatmul.mubr.f32.gmra.mrb[0].mxu0 %v1759
        %v1857 = vpop.f32.mrb[0].mxu0
        %v1858 = vadd.f32 0.0, %v1857
        %v1859 = vpop.f32.mrb[0].mxu0
        %1860 = vdwg.mxu0
        %1861 = vst [vmem:[%s225] sm:$0xff] %v1843
        %1862 = vst [vmem:[%s225 + $0x8] sm:$0xff] %v1848
        %1863 = vst [vmem:[%s225 + $0x10] sm:$0xff] %v1853
        %1864 = vst [vmem:[%s225 + $0x18] sm:$0xff] %v1858
        %s1865 = sand.u32 %s129, 1
        %s1866 = sand.u32 %s129, 1
        %s1867 = smul.addr %s1866, 32
        %s1868 = scalar_lea.vmem [#allocation4], %s1867
        // Predicated region
        $region37: #{dice_embeddings.1} parent=35 // pred_check
          %p1869 = pneg %p139
        $region38: #{dice_embeddings.1} parent=35 // pred_check_branch
          %1871 = sbr.rel (%p1869) target = $region40
        $region39: #{dice_embeddings.1} parent=35 // pred_region
          %s1872 = smul.addr %s17, 8
          %s1873 = scalar_lea.vmem %s5, %s1872
          // Predicated region
          $region41: #{dice_embeddings.1} parent=39 // pred_check
            _
          $region42: #{dice_embeddings.1} parent=39 // pred_check_branch
            %1875 = sbr.rel (0) target = $region44
          $region43: #{dice_embeddings.1} parent=39 // pred_region
            // Predicated region
            $region45: #{dice_embeddings.1} parent=43 // pred_check
              _
            $region46: #{dice_embeddings.1} parent=43 // pred_check_branch
              %1877 = sbr.rel (0) target = $region48
            $region47: #{dice_embeddings.1} parent=43 // pred_region
              // Predicated region
              $region60: #{dice_embeddings.1} parent=47 // pred_check
                _
              $region61: #{dice_embeddings.1} parent=47 // pred_check_branch
                %1898 = sbr.rel (0) target = $region63
              $region62: #{dice_embeddings.1} parent=47 // pred_region
                loop: start=0, step=1, limit=1
                $region64: #{dice_embeddings.1} parent=62 // loop_pre_header
                  _
                $region65: #{dice_embeddings.1} parent=62 // loop_header
                  %s1900 = sphi 0, %s1904
                  %p1901 = scmp.ge.s32.totalorder %s1900, 1
                  %s1905 = sphi %s1868, %s1868
                  %s1906 = sphi %s1873, %s1873
                $region66: #{dice_embeddings.1} parent=62 // loop_header_branch
                  %1903 = sbr.rel (%p1901) target = $region70
                $region67: #{dice_embeddings.1} parent=62 // loop_body
                  %v1907 = vld [vmem:[%s1905] sm:$0xff]
                  %1908 = vst [vmem:[%s1906] sm:$0xff] %v1907
                  %v1909 = vld [vmem:[%s1905 + $0x8] sm:$0xff]
                  %1910 = vst [vmem:[%s1906 + $0x10] sm:$0xff] %v1909
                  %v1911 = vld [vmem:[%s1905 + $0x10] sm:$0xff]
                  %1912 = vst [vmem:[%s1906 + $0x20] sm:$0xff] %v1911
                  %v1913 = vld [vmem:[%s1905 + $0x18] sm:$0xff]
                  %1914 = vst [vmem:[%s1906 + $0x30] sm:$0xff] %v1913
                $region68: #{dice_embeddings.1} parent=62 // loop_footer
                  %s1904 = sadd.s32 1, %s1900
                $region69: #{dice_embeddings.1} parent=62 // loop_footer_branch
                  %1899 = sbr.rel target = $region65
                $region70: #{dice_embeddings.1} parent=62 // loop_exit
                  _
              $region63: #{dice_embeddings.1} parent=47 // pred_fallthru
                _
              // Predicated region
              $region71: #{dice_embeddings.1} parent=47 // pred_check
                _
              $region72: #{dice_embeddings.1} parent=47 // pred_check_branch
                %1916 = sbr.rel target = $region74
              $region73: #{dice_embeddings.1} parent=47 // pred_region
                _
              $region74: #{dice_embeddings.1} parent=47 // pred_fallthru
                _
            $region48: #{dice_embeddings.1} parent=43 // pred_fallthru
              _
            // Predicated region
            $region49: #{dice_embeddings.1} parent=43 // pred_check
              _
            $region50: #{dice_embeddings.1} parent=43 // pred_check_branch
              %1879 = sbr.rel target = $region52
            $region51: #{dice_embeddings.1} parent=43 // pred_region
              loop: start=0, step=1, limit=1
              $region53: #{dice_embeddings.1} parent=51 // loop_pre_header
                _
              $region54: #{dice_embeddings.1} parent=51 // loop_header
                %s1882 = sphi 0, %s1886
                %p1883 = scmp.ge.s32.totalorder %s1882, 1
                %s1887 = sphi %s1868, %s1868
                %s1888 = sphi %s1873, %s1873
              $region55: #{dice_embeddings.1} parent=51 // loop_header_branch
                %1885 = sbr.rel (%p1883) target = $region59
              $region56: #{dice_embeddings.1} parent=51 // loop_body
                %v1889 = vld [vmem:[%s1887] sm:$0xff]
                %1890 = vst [vmem:[%s1888] sm:$0xff] %v1889
                %v1891 = vld [vmem:[%s1887 + $0x8] sm:$0xff]
                %1892 = vst [vmem:[%s1888 + $0x10] sm:$0xff] %v1891
                %v1893 = vld [vmem:[%s1887 + $0x10] sm:$0xff]
                %1894 = vst [vmem:[%s1888 + $0x20] sm:$0xff] %v1893
                %v1895 = vld [vmem:[%s1887 + $0x18] sm:$0xff]
                %1896 = vst [vmem:[%s1888 + $0x30] sm:$0xff] %v1895
              $region57: #{dice_embeddings.1} parent=51 // loop_footer
                %s1886 = sadd.s32 1, %s1882
              $region58: #{dice_embeddings.1} parent=51 // loop_footer_branch
                %1881 = sbr.rel target = $region54
              $region59: #{dice_embeddings.1} parent=51 // loop_exit
                _
            $region52: #{dice_embeddings.1} parent=43 // pred_fallthru
              _
          $region44: #{dice_embeddings.1} parent=39 // pred_fallthru
            _
          %1917 = vnop
        $region40: #{dice_embeddings.1} parent=35 // pred_fallthru
          _
      $region36: #{dice_embeddings.1} parent=5 // pred_fallthru
        _
      %p1918 = scmp.le.s32.totalorder 2, %s12
      // Predicated region
      $region75: #{dice_embeddings.1} parent=5 // pred_check
        %p1919 = pneg %p1918
      $region76: #{dice_embeddings.1} parent=5 // pred_check_branch
        %1921 = sbr.rel (%p1919) target = $region78
      $region77: #{dice_embeddings.1} parent=5 // pred_region
        %s1922 = ssub.s32 %s12, 2
        // Predicated region
        $region79: #{dice_embeddings.1} parent=77 // pred_check
          %p1923 = pneg %p145
        $region80: #{dice_embeddings.1} parent=77 // pred_check_branch
          %1925 = sbr.rel (%p1923) target = $region82
        $region81: #{dice_embeddings.1} parent=77 // pred_region
          %s1926 = sand.u32 %s130, 1
          %s1927 = sand.u32 %s130, 1
          %s1928 = smul.addr %s1927, 32
          %s1929 = scalar_lea.vmem [#allocation4], %s1928
        $region82: #{dice_embeddings.1} parent=77 // pred_fallthru
          _
      $region78: #{dice_embeddings.1} parent=5 // pred_fallthru
        _
    $region6: #{dice_embeddings.1} parent=1 // loop_footer
      %s16 = sadd.s32 1, %s12
    $region7: #{dice_embeddings.1} parent=1 // loop_footer_branch
      %11 = sbr.rel target = $region3
    $region8: #{dice_embeddings.1} parent=1 // loop_exit
      _

</llo_original>
